<compile_context>
chip_gen: v7x
topology: tpu7x:2x2x1
jax: 0.10.0
libtpu: 0.0.40
codegen_flags: <defaults>
</compile_context>

<pallas_src>
import math
import functools

import jax
import jax.numpy as jnp
from jax import lax
from jax.experimental import pallas as pl
from jax.experimental.pallas import tpu as pltpu


def _bert_self_attention_kernel(xq_ref, xkv_ref, wq_ref, bq_ref, wkv_ref, bkv_ref,
                                o_ref, kv_ref, *, num_heads, head_dim,
                                compute_dtype, approx_recip):
    # xq_ref:  (1, tq, H)  query rows for this tile
    # xkv_ref: (1, S,  H)  full sequence (for K / V)
    # wq_ref:  (H, H)   pre-transposed (in, out)     bq_ref:  (1, H)   f32
    # wkv_ref: (H, 2H)  pre-transposed [Wk^T|Wv^T]   bkv_ref: (1, 2H)  f32
    # kv_ref:  (S, 2H)  VMEM scratch, persists across the query-tile axis
    H = num_heads * head_dim
    inv_sqrt_d = 1.0 / math.sqrt(head_dim)

    # Fused K/V projection: compute once per batch element (query-tile axis is the
    # innermost / "arbitrary" grid axis, kv_ref carries the result across it).
    @pl.when(pl.program_id(1) == 0)
    def _():
        xkv = xkv_ref[0]                                                       # (S, H)
        kv = jnp.dot(xkv, wkv_ref[...],
                     preferred_element_type=jnp.float32) + bkv_ref[...]        # (S, 2H) f32
        kv_ref[...] = kv.astype(kv_ref.dtype)

    xq = xq_ref[0]                                                             # (tq, H)
    q = jnp.dot(xq, wq_ref[...],
                preferred_element_type=jnp.float32) + bq_ref[...]              # (tq, H) f32

    # TODO(synk): for production shapes with head_dim < 128, process heads in
    # 128-lane groups (batched over heads) to avoid per-head sub-vreg lane slices.
    for h in range(num_heads):                       # static loop over heads
        sl = slice(h * head_dim, (h + 1) * head_dim)
        qh = q[:, sl].astype(compute_dtype)                                    # (tq, dh)
        kh = kv_ref[:, sl]                                                     # (S, dh)
        vh = kv_ref[:, H + h * head_dim:H + (h + 1) * head_dim]                # (S, dh)

        # scores = qh @ kh^T via dot_general (contraction on head dim, no k^T copy).
        s = lax.dot_general(qh, kh, (((1,), (1,)), ((), ())),
                            preferred_element_type=jnp.float32) * inv_sqrt_d   # (tq, S)

        # Softmax kept in f32 regardless of MXU operand dtype.
        s = s - jnp.max(s, axis=-1, keepdims=True)
        e = jnp.exp(s)
        denom = jnp.sum(e, axis=-1, keepdims=True)
        p = e * pl.reciprocal(denom, approx=approx_recip)
        # TODO(synk): attention-probs dropout omitted (eval mode); attention/head/skim
        # masks and relative position embeddings not used on the default path.

        ctx = jnp.dot(p.astype(compute_dtype), vh,
                      preferred_element_type=jnp.float32)                      # (tq, dh)

        # permute(0,2,1,3) + view in PyTorch == writing each head at its hidden offset.
        o_ref[0, :, sl] = ctx.astype(o_ref.dtype)


def _pick_q_tile(S):
    if S <= 512:
        return S
    for t in (512, 256, 128, 64, 32, 16, 8):
        if S % t == 0:
            return t
    return S


def _vmem_limit_bytes(S, H, tq, in_itemsize, compute_itemsize):
    f32 = 4
    # Double-buffered pipeline blocks (inputs + output).
    blocks = 2 * (
        (tq * H + S * H) * in_itemsize          # x_q + x_kv blocks
        + 3 * H * H * in_itemsize               # Wq^T (H,H) + [Wk^T|Wv^T] (H,2H)
        + 3 * H * f32                           # fused biases
        + tq * H * f32                          # output block
    )
    scratch = S * 2 * H * compute_itemsize      # persistent KV scratch
    # In-kernel temporaries (q in f32; per-head scores / probs / ctx in f32).
    temps = 3 * tq * H * f32 + 4 * tq * S * f32
    est = int((blocks + scratch + temps) * 1.5)
    return max(32 * 1024 * 1024, min(est, 64 * 1024 * 1024))


def bert_self_attention(hidden_states, wq, bq, wk, bk, wv, bv, *, num_heads,
                        mxu_dtype=None, q_tile=None):
    B, S, H = hidden_states.shape
    assert H % num_heads == 0
    head_dim = H // num_heads

    # One-time wrapper-side prep: pre-transpose weights (PyTorch: y = x @ W.T + b)
    # and fuse K/V into a single (H, 2H) matmul.  Biases stay f32.
    wq_t = wq.T                                            # (H, H)
    wkv_t = jnp.concatenate([wk.T, wv.T], axis=1)          # (H, 2H)
    bq2 = bq.reshape(1, H).astype(jnp.float32)
    bkv2 = jnp.concatenate([bk, bv]).reshape(1, 2 * H).astype(jnp.float32)

    x = hidden_states
    if mxu_dtype is not None:                              # bf16 MXU operands, f32 accumulation
        x = x.astype(mxu_dtype)
        wq_t = wq_t.astype(mxu_dtype)
        wkv_t = wkv_t.astype(mxu_dtype)
    compute_dtype = jnp.dtype(mxu_dtype) if mxu_dtype is not None else jnp.dtype(jnp.float32)

    tq = q_tile if q_tile is not None else _pick_q_tile(S)
    assert S % tq == 0
    nq = S // tq

    kernel = functools.partial(
        _bert_self_attention_kernel,
        num_heads=num_heads, head_dim=head_dim,
        compute_dtype=compute_dtype,
        approx_recip=(mxu_dtype is not None))

    # NOTE: weight/bias/x_kv index maps only change with the batch axis, so Pallas
    # re-DMAs them at most once per batch element.
    in_specs = [
        pl.BlockSpec((1, tq, H), lambda b, qi: (b, qi, 0)),   # x (query-tile rows)
        pl.BlockSpec((1, S, H), lambda b, qi: (b, 0, 0)),     # x (full sequence, K/V)
        pl.BlockSpec((H, H), lambda b, qi: (0, 0)),           # Wq^T
        pl.BlockSpec((1, H), lambda b, qi: (0, 0)),           # bq
        pl.BlockSpec((H, 2 * H), lambda b, qi: (0, 0)),       # [Wk^T | Wv^T]
        pl.BlockSpec((1, 2 * H), lambda b, qi: (0, 0)),       # [bk | bv]
    ]
    out_spec = pl.BlockSpec((1, tq, H), lambda b, qi: (b, qi, 0))

    return pl.pallas_call(
        kernel,
        out_shape=jax.ShapeDtypeStruct((B, S, H), hidden_states.dtype),
        grid_spec=pltpu.PrefetchScalarGridSpec(
            num_scalar_prefetch=0,
            grid=(B, nq),
            in_specs=in_specs,
            out_specs=out_spec,
            scratch_shapes=[pltpu.VMEM((S, 2 * H), compute_dtype)],
        ),
        compiler_params=pltpu.CompilerParams(
            # qi carries the KV scratch -> "arbitrary"; batch axis stays "parallel"
            # (megacore shards it across TensorCores with per-core scratch).
            dimension_semantics=("parallel", "arbitrary"),
            vmem_limit_bytes=_vmem_limit_bytes(
                S, H, tq, jnp.dtype(x.dtype).itemsize, compute_dtype.itemsize)),
    )(x, x, wq_t, bq2, wkv_t, bkv2)


def _reference(hidden_states, wq, bq, wk, bk, wv, bv, *, num_heads):
    B, S, H = hidden_states.shape
    dh = H // num_heads

    def proj(w, b):
        y = jnp.einsum('bsh,oh->bso', hidden_states, w) + b
        return y.reshape(B, S, num_heads, dh).transpose(0, 2, 1, 3)  # (B, nh, S, dh)

    q = proj(wq, bq)
    k = proj(wk, bk)
    v = proj(wv, bv)
    scores = jnp.einsum('bhqd,bhkd->bhqk', q, k) / math.sqrt(dh)
    probs = jax.nn.softmax(scores, axis=-1)
    ctx = jnp.einsum('bhqk,bhkd->bhqd', probs, v)
    return ctx.transpose(0, 2, 1, 3).reshape(B, S, H)


if __name__ == "__main__":
    # Toy config: hidden_size=32, num_attention_heads=4, seq=8, batch=2.
    # NOTE: every dim is below the (8,128) vreg tile, so this config only checks
    # correctness; benchmark only at real BERT shapes (S>=128, H>=768).
    B, S, H, NUM_HEADS = 2, 8, 32, 4

    key = jax.random.PRNGKey(0)
    ks = jax.random.split(key, 7)
    hidden_states = jax.random.normal(ks[0], (B, S, H), dtype=jnp.float32)
    scale = 1.0 / math.sqrt(H)
    wq = jax.random.normal(ks[1], (H, H), dtype=jnp.float32) * scale
    bq = jax.random.normal(ks[2], (H,), dtype=jnp.float32) * 0.01
    wk = jax.random.normal(ks[3], (H, H), dtype=jnp.float32) * scale
    bk = jax.random.normal(ks[4], (H,), dtype=jnp.float32) * 0.01
    wv = jax.random.normal(ks[5], (H, H), dtype=jnp.float32) * scale
    bv = jax.random.normal(ks[6], (H,), dtype=jnp.float32) * 0.01

    ref = _reference(hidden_states, wq, bq, wk, bk, wv, bv, num_heads=NUM_HEADS)

    # f32 path (exact): must match the reference tightly.
    out = bert_self_attention(hidden_states, wq, bq, wk, bk, wv, bv,
                              num_heads=NUM_HEADS)
    out = jax.block_until_ready(out)
    assert out.shape == (B, S, H)
    assert jnp.allclose(out, ref, atol=1e-4, rtol=1e-4), "f32 mismatch vs reference"

    # bf16-MXU path (f32 accumulation + f32 softmax): looser tolerance.
    out_bf16 = bert_self_attention(hidden_states, wq, bq, wk, bk, wv, bv,
                                   num_heads=NUM_HEADS, mxu_dtype=jnp.bfloat16)
    out_bf16 = jax.block_until_ready(out_bf16)
    assert jnp.allclose(out_bf16, ref, atol=1e-1, rtol=1e-1), "bf16 mismatch vs reference"

    print("KERNEL_OK")
</pallas_src>

<mosaic_0001>
module attributes {stable_mosaic.version = 11 : i64} {
  func.func @_bert_self_attention_kernel(%arg0: i32, %arg1: i32, %arg2: memref<1x8x32xf32, #tpu.memory_space<vmem>>, %arg3: memref<1x8x32xf32, #tpu.memory_space<vmem>>, %arg4: memref<32x32xf32, #tpu.memory_space<vmem>>, %arg5: memref<1x32xf32, #tpu.memory_space<vmem>>, %arg6: memref<32x64xf32, #tpu.memory_space<vmem>>, %arg7: memref<1x64xf32, #tpu.memory_space<vmem>>, %arg8: memref<1x8x32xf32, #tpu.memory_space<vmem>>, %arg9: memref<8x64xf32, #tpu.memory_space<vmem>>) attributes {dimension_semantics = [#tpu.dimension_semantics<parallel>, #tpu.dimension_semantics<arbitrary>], iteration_bounds = array<i64: 2, 1>, scalar_prefetch = 0 : i64, scratch_operands = 1 : i64, tpu.core_type = #tpu.core_type<tc>, window_params = [{transform_indices = @transform_0, window_bounds = array<i64: 1, 8, 32>}, {transform_indices = @transform_1, window_bounds = array<i64: 1, 8, 32>}, {pipeline_mode = #tpu.pipeline_mode<synchronous>, transform_indices = @transform_2, window_bounds = array<i64: 32, 32>}, {pipeline_mode = #tpu.pipeline_mode<synchronous>, transform_indices = @transform_3, window_bounds = array<i64: 1, 32>}, {pipeline_mode = #tpu.pipeline_mode<synchronous>, transform_indices = @transform_4, window_bounds = array<i64: 32, 64>}, {pipeline_mode = #tpu.pipeline_mode<synchronous>, transform_indices = @transform_5, window_bounds = array<i64: 1, 64>}, {transform_indices = @transform_6, window_bounds = array<i64: 1, 8, 32>}]} {
    %c0_i32 = arith.constant 0 : i32
    %0 = arith.cmpi eq, %arg1, %c0_i32 : i32
    %1 = arith.extui %0 : i1 to i32
    %c0_i32_0 = arith.constant 0 : i32
    %2 = arith.cmpi ne, %1, %c0_i32_0 : i32
    scf.if %2 {
      %c0_48 = arith.constant 0 : index
      %c0_49 = arith.constant 0 : index
      %c0_50 = arith.constant 0 : index
      %90 = vector.load %arg3[%c0_48, %c0_49, %c0_50] : memref<1x8x32xf32, #tpu.memory_space<vmem>>, vector<1x8x32xf32>
      %91 = vector.shape_cast %90 : vector<1x8x32xf32> to vector<8x32xf32>
      %c0_51 = arith.constant 0 : index
      %c0_52 = arith.constant 0 : index
      %92 = vector.load %arg6[%c0_51, %c0_52] : memref<32x64xf32, #tpu.memory_space<vmem>>, vector<32x64xf32>
      %cst_53 = arith.constant dense<0.000000e+00> : vector<8x64xf32>
      %93 = tpu.matmul %91, %92, %cst_53 {dimension_numbers = #tpu.dot_dimension_numbers<[1], [0], [0], [1], [0, 0, 1, 1], [], []>} : vector<8x32xf32>, vector<32x64xf32>, vector<8x64xf32> -> vector<8x64xf32>
      %c0_54 = arith.constant 0 : index
      %c0_55 = arith.constant 0 : index
      %94 = vector.load %arg7[%c0_54, %c0_55] : memref<1x64xf32, #tpu.memory_space<vmem>>, vector<1x64xf32>
      %95 = vector.broadcast %94 : vector<1x64xf32> to vector<8x64xf32>
      %96 = arith.addf %93, %95 : vector<8x64xf32>
      %c0_56 = arith.constant 0 : index
      %c0_57 = arith.constant 0 : index
      %97 = vector.load %arg9[%c0_56, %c0_57] : memref<8x64xf32, #tpu.memory_space<vmem>>, vector<8x64xf32>
      tpu.vector_store %arg9[%c0_56, %c0_57], %96 {strides = array<i32>} : memref<8x64xf32, #tpu.memory_space<vmem>>, vector<8x64xf32>,
    } else {
    }
    %c0 = arith.constant 0 : index
    %c0_1 = arith.constant 0 : index
    %c0_2 = arith.constant 0 : index
    %3 = vector.load %arg2[%c0, %c0_1, %c0_2] : memref<1x8x32xf32, #tpu.memory_space<vmem>>, vector<1x8x32xf32>
    %4 = vector.shape_cast %3 : vector<1x8x32xf32> to vector<8x32xf32>
    %c0_3 = arith.constant 0 : index
    %c0_4 = arith.constant 0 : index
    %5 = vector.load %arg4[%c0_3, %c0_4] : memref<32x32xf32, #tpu.memory_space<vmem>>, vector<32x32xf32>
    %cst = arith.constant dense<0.000000e+00> : vector<8x32xf32>
    %6 = tpu.matmul %4, %5, %cst {dimension_numbers = #tpu.dot_dimension_numbers<[1], [0], [0], [1], [0, 0, 1, 1], [], []>} : vector<8x32xf32>, vector<32x32xf32>, vector<8x32xf32> -> vector<8x32xf32>
    %c0_5 = arith.constant 0 : index
    %c0_6 = arith.constant 0 : index
    %7 = vector.load %arg5[%c0_5, %c0_6] : memref<1x32xf32, #tpu.memory_space<vmem>>, vector<1x32xf32>
    %8 = vector.broadcast %7 : vector<1x32xf32> to vector<8x32xf32>
    %9 = arith.addf %6, %8 : vector<8x32xf32>
    %10 = vector.extract_strided_slice %9 {offsets = [0, 0], sizes = [8, 8], strides = [1, 1]} : vector<8x32xf32> to vector<8x8xf32>
    %c0_7 = arith.constant 0 : index
    %c0_8 = arith.constant 0 : index
    %11 = vector.load %arg9[%c0_7, %c0_8] : memref<8x64xf32, #tpu.memory_space<vmem>>, vector<8x8xf32>
    %c0_9 = arith.constant 0 : index
    %c32 = arith.constant 32 : index
    %12 = vector.load %arg9[%c0_9, %c32] : memref<8x64xf32, #tpu.memory_space<vmem>>, vector<8x8xf32>
    %cst_10 = arith.constant dense<0.000000e+00> : vector<8x8xf32>
    %13 = tpu.matmul %10, %11, %cst_10 {dimension_numbers = #tpu.dot_dimension_numbers<[1], [1], [0], [0], [0, 0, 1, 0], [], []>} : vector<8x8xf32>, vector<8x8xf32>, vector<8x8xf32> -> vector<8x8xf32>
    %cst_11 = arith.constant 0.353553385 : f32
    %14 = vector.broadcast %cst_11 : f32 to vector<8x8xf32>
    %15 = arith.mulf %13, %14 : vector<8x8xf32>
    %cst_12 = arith.constant dense<0xFF800000> : vector<8xf32>
    %16 = vector.multi_reduction <maximumf>, %15, %cst_12 [1] : vector<8x8xf32> to vector<8xf32>
    %17 = vector.shape_cast %16 : vector<8xf32> to vector<8x1xf32>
    %18 = vector.broadcast %17 : vector<8x1xf32> to vector<8x8xf32>
    %19 = arith.subf %15, %18 : vector<8x8xf32>
    %20 = math.exp %19 : vector<8x8xf32>
    %cst_13 = arith.constant dense<0.000000e+00> : vector<8xf32>
    %21 = vector.multi_reduction <add>, %20, %cst_13 [1] : vector<8x8xf32> to vector<8xf32>
    %22 = vector.shape_cast %21 : vector<8xf32> to vector<8x1xf32>
    %23 = tpu.reciprocal %22 : vector<8x1xf32> -> vector<8x1xf32>
    %24 = vector.broadcast %23 : vector<8x1xf32> to vector<8x8xf32>
    %25 = arith.mulf %20, %24 : vector<8x8xf32>
    %cst_14 = arith.constant dense<0.000000e+00> : vector<8x8xf32>
    %26 = tpu.matmul %25, %12, %cst_14 {dimension_numbers = #tpu.dot_dimension_numbers<[1], [0], [0], [1], [0, 0, 1, 1], [], []>} : vector<8x8xf32>, vector<8x8xf32>, vector<8x8xf32> -> vector<8x8xf32>
    %c0_15 = arith.constant 0 : index
    %c0_16 = arith.constant 0 : index
    %c0_17 = arith.constant 0 : index
    %27 = vector.load %arg8[%c0_15, %c0_16, %c0_17] : memref<1x8x32xf32, #tpu.memory_space<vmem>>, vector<1x8x8xf32>
    %28 = vector.shape_cast %27 : vector<1x8x8xf32> to vector<8x8xf32>
    %29 = vector.shape_cast %26 : vector<8x8xf32> to vector<1x8x8xf32>
    tpu.vector_store %arg8[%c0_15, %c0_16, %c0_17], %29 {strides = array<i32>} : memref<1x8x32xf32, #tpu.memory_space<vmem>>, vector<1x8x8xf32>,
    %30 = vector.extract_strided_slice %9 {offsets = [0, 8], sizes = [8, 8], strides = [1, 1]} : vector<8x32xf32> to vector<8x8xf32>
    %c0_18 = arith.constant 0 : index
    %c8 = arith.constant 8 : index
    %31 = vector.load %arg9[%c0_18, %c8] : memref<8x64xf32, #tpu.memory_space<vmem>>, vector<8x8xf32>
    %c0_19 = arith.constant 0 : index
    %c40 = arith.constant 40 : index
    %32 = vector.load %arg9[%c0_19, %c40] : memref<8x64xf32, #tpu.memory_space<vmem>>, vector<8x8xf32>
    %cst_20 = arith.constant dense<0.000000e+00> : vector<8x8xf32>
    %33 = tpu.matmul %30, %31, %cst_20 {dimension_numbers = #tpu.dot_dimension_numbers<[1], [1], [0], [0], [0, 0, 1, 0], [], []>} : vector<8x8xf32>, vector<8x8xf32>, vector<8x8xf32> -> vector<8x8xf32>
    %cst_21 = arith.constant 0.353553385 : f32
    %34 = vector.broadcast %cst_21 : f32 to vector<8x8xf32>
    %35 = arith.mulf %33, %34 : vector<8x8xf32>
    %cst_22 = arith.constant dense<0xFF800000> : vector<8xf32>
    %36 = vector.multi_reduction <maximumf>, %35, %cst_22 [1] : vector<8x8xf32> to vector<8xf32>
    %37 = vector.shape_cast %36 : vector<8xf32> to vector<8x1xf32>
    %38 = vector.broadcast %37 : vector<8x1xf32> to vector<8x8xf32>
    %39 = arith.subf %35, %38 : vector<8x8xf32>
    %40 = math.exp %39 : vector<8x8xf32>
    %cst_23 = arith.constant dense<0.000000e+00> : vector<8xf32>
    %41 = vector.multi_reduction <add>, %40, %cst_23 [1] : vector<8x8xf32> to vector<8xf32>
    %42 = vector.shape_cast %41 : vector<8xf32> to vector<8x1xf32>
    %43 = tpu.reciprocal %42 : vector<8x1xf32> -> vector<8x1xf32>
    %44 = vector.broadcast %43 : vector<8x1xf32> to vector<8x8xf32>
    %45 = arith.mulf %40, %44 : vector<8x8xf32>
    %cst_24 = arith.constant dense<0.000000e+00> : vector<8x8xf32>
    %46 = tpu.matmul %45, %32, %cst_24 {dimension_numbers = #tpu.dot_dimension_numbers<[1], [0], [0], [1], [0, 0, 1, 1], [], []>} : vector<8x8xf32>, vector<8x8xf32>, vector<8x8xf32> -> vector<8x8xf32>
    %c0_25 = arith.constant 0 : index
    %c0_26 = arith.constant 0 : index
    %c8_27 = arith.constant 8 : index
    %47 = vector.load %arg8[%c0_25, %c0_26, %c8_27] : memref<1x8x32xf32, #tpu.memory_space<vmem>>, vector<1x8x8xf32>
    %48 = vector.shape_cast %47 : vector<1x8x8xf32> to vector<8x8xf32>
    %49 = vector.shape_cast %46 : vector<8x8xf32> to vector<1x8x8xf32>
    tpu.vector_store %arg8[%c0_25, %c0_26, %c8_27], %49 {strides = array<i32>} : memref<1x8x32xf32, #tpu.memory_space<vmem>>, vector<1x8x8xf32>,
    %50 = vector.extract_strided_slice %9 {offsets = [0, 16], sizes = [8, 8], strides = [1, 1]} : vector<8x32xf32> to vector<8x8xf32>
    %c0_28 = arith.constant 0 : index
    %c16 = arith.constant 16 : index
    %51 = vector.load %arg9[%c0_28, %c16] : memref<8x64xf32, #tpu.memory_space<vmem>>, vector<8x8xf32>
    %c0_29 = arith.constant 0 : index
    %c48 = arith.constant 48 : index
    %52 = vector.load %arg9[%c0_29, %c48] : memref<8x64xf32, #tpu.memory_space<vmem>>, vector<8x8xf32>
    %cst_30 = arith.constant dense<0.000000e+00> : vector<8x8xf32>
    %53 = tpu.matmul %50, %51, %cst_30 {dimension_numbers = #tpu.dot_dimension_numbers<[1], [1], [0], [0], [0, 0, 1, 0], [], []>} : vector<8x8xf32>, vector<8x8xf32>, vector<8x8xf32> -> vector<8x8xf32>
    %cst_31 = arith.constant 0.353553385 : f32
    %54 = vector.broadcast %cst_31 : f32 to vector<8x8xf32>
    %55 = arith.mulf %53, %54 : vector<8x8xf32>
    %cst_32 = arith.constant dense<0xFF800000> : vector<8xf32>
    %56 = vector.multi_reduction <maximumf>, %55, %cst_32 [1] : vector<8x8xf32> to vector<8xf32>
    %57 = vector.shape_cast %56 : vector<8xf32> to vector<8x1xf32>
    %58 = vector.broadcast %57 : vector<8x1xf32> to vector<8x8xf32>
    %59 = arith.subf %55, %58 : vector<8x8xf32>
    %60 = math.exp %59 : vector<8x8xf32>
    %cst_33 = arith.constant dense<0.000000e+00> : vector<8xf32>
    %61 = vector.multi_reduction <add>, %60, %cst_33 [1] : vector<8x8xf32> to vector<8xf32>
    %62 = vector.shape_cast %61 : vector<8xf32> to vector<8x1xf32>
    %63 = tpu.reciprocal %62 : vector<8x1xf32> -> vector<8x1xf32>
    %64 = vector.broadcast %63 : vector<8x1xf32> to vector<8x8xf32>
    %65 = arith.mulf %60, %64 : vector<8x8xf32>
    %cst_34 = arith.constant dense<0.000000e+00> : vector<8x8xf32>
    %66 = tpu.matmul %65, %52, %cst_34 {dimension_numbers = #tpu.dot_dimension_numbers<[1], [0], [0], [1], [0, 0, 1, 1], [], []>} : vector<8x8xf32>, vector<8x8xf32>, vector<8x8xf32> -> vector<8x8xf32>
    %c0_35 = arith.constant 0 : index
    %c0_36 = arith.constant 0 : index
    %c16_37 = arith.constant 16 : index
    %67 = vector.load %arg8[%c0_35, %c0_36, %c16_37] : memref<1x8x32xf32, #tpu.memory_space<vmem>>, vector<1x8x8xf32>
    %68 = vector.shape_cast %67 : vector<1x8x8xf32> to vector<8x8xf32>
    %69 = vector.shape_cast %66 : vector<8x8xf32> to vector<1x8x8xf32>
    tpu.vector_store %arg8[%c0_35, %c0_36, %c16_37], %69 {strides = array<i32>} : memref<1x8x32xf32, #tpu.memory_space<vmem>>, vector<1x8x8xf32>,
    %70 = vector.extract_strided_slice %9 {offsets = [0, 24], sizes = [8, 8], strides = [1, 1]} : vector<8x32xf32> to vector<8x8xf32>
    %c0_38 = arith.constant 0 : index
    %c24 = arith.constant 24 : index
    %71 = vector.load %arg9[%c0_38, %c24] : memref<8x64xf32, #tpu.memory_space<vmem>>, vector<8x8xf32>
    %c0_39 = arith.constant 0 : index
    %c56 = arith.constant 56 : index
    %72 = vector.load %arg9[%c0_39, %c56] : memref<8x64xf32, #tpu.memory_space<vmem>>, vector<8x8xf32>
    %cst_40 = arith.constant dense<0.000000e+00> : vector<8x8xf32>
    %73 = tpu.matmul %70, %71, %cst_40 {dimension_numbers = #tpu.dot_dimension_numbers<[1], [1], [0], [0], [0, 0, 1, 0], [], []>} : vector<8x8xf32>, vector<8x8xf32>, vector<8x8xf32> -> vector<8x8xf32>
    %cst_41 = arith.constant 0.353553385 : f32
    %74 = vector.broadcast %cst_41 : f32 to vector<8x8xf32>
    %75 = arith.mulf %73, %74 : vector<8x8xf32>
    %cst_42 = arith.constant dense<0xFF800000> : vector<8xf32>
    %76 = vector.multi_reduction <maximumf>, %75, %cst_42 [1] : vector<8x8xf32> to vector<8xf32>
    %77 = vector.shape_cast %76 : vector<8xf32> to vector<8x1xf32>
    %78 = vector.broadcast %77 : vector<8x1xf32> to vector<8x8xf32>
    %79 = arith.subf %75, %78 : vector<8x8xf32>
    %80 = math.exp %79 : vector<8x8xf32>
    %cst_43 = arith.constant dense<0.000000e+00> : vector<8xf32>
    %81 = vector.multi_reduction <add>, %80, %cst_43 [1] : vector<8x8xf32> to vector<8xf32>
    %82 = vector.shape_cast %81 : vector<8xf32> to vector<8x1xf32>
    %83 = tpu.reciprocal %82 : vector<8x1xf32> -> vector<8x1xf32>
    %84 = vector.broadcast %83 : vector<8x1xf32> to vector<8x8xf32>
    %85 = arith.mulf %80, %84 : vector<8x8xf32>
    %cst_44 = arith.constant dense<0.000000e+00> : vector<8x8xf32>
    %86 = tpu.matmul %85, %72, %cst_44 {dimension_numbers = #tpu.dot_dimension_numbers<[1], [0], [0], [1], [0, 0, 1, 1], [], []>} : vector<8x8xf32>, vector<8x8xf32>, vector<8x8xf32> -> vector<8x8xf32>
    %c0_45 = arith.constant 0 : index
    %c0_46 = arith.constant 0 : index
    %c24_47 = arith.constant 24 : index
    %87 = vector.load %arg8[%c0_45, %c0_46, %c24_47] : memref<1x8x32xf32, #tpu.memory_space<vmem>>, vector<1x8x8xf32>
    %88 = vector.shape_cast %87 : vector<1x8x8xf32> to vector<8x8xf32>
    %89 = vector.shape_cast %86 : vector<8x8xf32> to vector<1x8x8xf32>
    tpu.vector_store %arg8[%c0_45, %c0_46, %c24_47], %89 {strides = array<i32>} : memref<1x8x32xf32, #tpu.memory_space<vmem>>, vector<1x8x8xf32>,
    return
  }
  func.func @transform_0(%arg0: i32, %arg1: i32) -> (i32, i32, i32) {
    %c0_i32 = arith.constant 0 : i32
    %c0_i32_0 = arith.constant 0 : i32
    return %arg0, %arg1, %c0_i32 : i32, i32, i32
  }
  func.func @transform_1(%arg0: i32, %arg1: i32) -> (i32, i32, i32) {
    %c0_i32 = arith.constant 0 : i32
    %c0_i32_0 = arith.constant 0 : i32
    %c0_i32_1 = arith.constant 0 : i32
    return %arg0, %c0_i32, %c0_i32_0 : i32, i32, i32
  }
  func.func @transform_2(%arg0: i32, %arg1: i32) -> (i32, i32) {
    %c0_i32 = arith.constant 0 : i32
    %c0_i32_0 = arith.constant 0 : i32
    %c0_i32_1 = arith.constant 0 : i32
    return %c0_i32, %c0_i32_0 : i32, i32
  }
  func.func @transform_3(%arg0: i32, %arg1: i32) -> (i32, i32) {
    %c0_i32 = arith.constant 0 : i32
    %c0_i32_0 = arith.constant 0 : i32
    %c0_i32_1 = arith.constant 0 : i32
    return %c0_i32, %c0_i32_0 : i32, i32
  }
  func.func @transform_4(%arg0: i32, %arg1: i32) -> (i32, i32) {
    %c0_i32 = arith.constant 0 : i32
    %c0_i32_0 = arith.constant 0 : i32
    %c0_i32_1 = arith.constant 0 : i32
    return %c0_i32, %c0_i32_0 : i32, i32
  }
  func.func @transform_5(%arg0: i32, %arg1: i32) -> (i32, i32) {
    %c0_i32 = arith.constant 0 : i32
    %c0_i32_0 = arith.constant 0 : i32
    %c0_i32_1 = arith.constant 0 : i32
    return %c0_i32, %c0_i32_0 : i32, i32
  }
  func.func @transform_6(%arg0: i32, %arg1: i32) -> (i32, i32, i32) {
    %c0_i32 = arith.constant 0 : i32
    %c0_i32_0 = arith.constant 0 : i32
    return %arg0, %arg1, %c0_i32 : i32, i32, i32
  }
}

</mosaic_0001>

<llo_original>
// kernel: tpu_custom_call.1
$region0: #{tpu_custom_call.1}
  #allocation0 [shape = 'u32[]', space=smem, size = 0x4, offset = 0x4, fixed_abs, tag = 'smem constant byte address 0x4 - core index']
  #allocation1 [shape = 'u32[144,128]{1,0:T(1,128)}', space=vmem, size = 0x12000, scoped, tag = 'internal scratch']
  #allocation2 [shape = 'f32[8,64]{1,0:T(8,128)}', space=vmem, size = 0x1000, scoped, tag = 'scratch operand']
  %s0 = inlined_call_operand.hbm [shape: f32[2,8,32], index: 0, kind: input, shape index: {}]
  %s1 = inlined_call_operand.hbm [shape: f32[2,8,32], index: 1, kind: input, shape index: {}]
  %s2 = inlined_call_operand.hbm [shape: f32[32,32], index: 2, kind: input, shape index: {}]
  %s3 = inlined_call_operand.vmem [shape: f32[1,32], index: 3, kind: input, shape index: {}]
  %s4 = inlined_call_operand.hbm [shape: f32[32,64], index: 4, kind: input, shape index: {}]
  %s5 = inlined_call_operand.vmem [shape: f32[1,64], index: 5, kind: input, shape index: {}]
  %s6 = inlined_call_operand.hbm [shape: f32[2,8,32], index: 6, kind: output, shape index: {}]
  %s7 = sld [smem:[#allocation0]]
  $region77: #{tpu_custom_call.1} parent=0
    _
  %s9 = ssub.s32 1, %s7
  %s10 = scalar_select 0, %s9, %s7
  $region1: #{tpu_custom_call.1} parent=0
    #allocation3 [shape = 'u8[8192]{0}', space=vmem, size = 0x2000, scoped, tag = 'input window, operand 0']
    #allocation4 [shape = 's32[2]{0}', space=sflag, size = 0x8, scoped, tag = 'scoped memory for tpu_custom_call.1']
    #allocation5 [shape = 's32[2]{0}', space=sflag, size = 0x8, scoped, tag = 'scoped memory for tpu_custom_call.1']
    #allocation6 [shape = 'u8[8192]{0}', space=vmem, size = 0x2000, scoped, tag = 'input window, operand 1']
    #allocation7 [shape = 's32[2]{0}', space=sflag, size = 0x8, scoped, tag = 'scoped memory for tpu_custom_call.1']
    #allocation8 [shape = 'u8[16384]{0}', space=vmem, size = 0x4000, scoped, tag = 'input window, operand 2, single buffered']
    #allocation9 [shape = 'u8[16384]{0}', space=vmem, size = 0x4000, scoped, tag = 'input window, operand 4, single buffered']
    #allocation10 [shape = 's32[1]{0}', space=sflag, size = 0x4, scoped, tag = 'scoped memory for tpu_custom_call.1']
    #allocation11 [shape = 'u8[8192]{0}', space=vmem, size = 0x2000, scoped, tag = 'output window, operand 0']
    %11 = vsyncpa [#allocation4], 0
    %s12 = scalar_lea.sflag [#allocation4], 1
    %13 = vsyncpa %s12, 0
    %14 = vsyncpa [#allocation7], 0
    %s15 = scalar_lea.sflag [#allocation7], 1
    %16 = vsyncpa %s15, 0
    %17 = vsyncpa [#allocation10], 0
    %18 = vsyncpa [#allocation5], 0
    %s19 = scalar_lea.sflag [#allocation5], 1
    %20 = vsyncpa %s19, 0
    loop: start=0, step=1, limit=4
    $region2: #{tpu_custom_call.1} parent=1 // loop_pre_header
      _
    $region3: #{tpu_custom_call.1} parent=1 // loop_header
      %s22 = sphi 0, %s26
      %p23 = scmp.ge.s32.totalorder %s22, 4
      %s29 = sphi 0, %s41
      %s30 = sphi 0, %s37
      %s31 = sphi 0, %s29
      %s32 = sphi 0, %s30
      %s33 = sphi 0, %s31
      %s34 = sphi 0, %s32
      %s46 = sphi 0, %s48
      %s49 = sphi 0, %s46
      %s50 = sphi 0, %s49
      %s66 = sphi 0, %s50
      %s72 = sphi 0, %s74
      %s75 = sphi 0, %s72
      %s76 = sphi 0, %s75
      %s92 = sphi 0, %s76
      %s96 = sphi 0, %s96
      %s98 = sphi 0, %s96
      %s99 = sphi 0, %s98
      %s113 = sphi 0, %s99
      %s117 = sphi 0, %s117
      %s119 = sphi 0, %s117
      %s120 = sphi 0, %s119
      %s134 = sphi 0, %s120
      %s138 = sphi 0, %s138
      %s140 = sphi 0, %s138
      %s141 = sphi 0, %s140
      %s155 = sphi 0, %s141
      %s159 = sphi 0, %s159
      %s161 = sphi 0, %s159
      %s162 = sphi 0, %s161
      %s176 = sphi 0, %s162
      %s184 = sphi 0, %s186
      %s187 = sphi 0, %s184
      %s188 = sphi 0, %s187
      %s204 = sphi 0, %s188
    $region4: #{tpu_custom_call.1} parent=1 // loop_header_branch
      %25 = sbr.rel (%p23) target = $region8
    $region5: #{tpu_custom_call.1} parent=1 // loop_body
      %s27 = ssub.s32 %s22, 1
      %s28 = ssub.s32 %s22, 2
      %s35 = sadd.s32 1, %s30
      %p36 = scmp.ge.s32.totalorder %s35, 1
      %s37 = scalar_select %p36, 0, %s35
      %s38 = sadd.s32 1, %s29
      %s39 = scalar_select %p36, %s38, %s29
      %p40 = scmp.ge.s32.totalorder %s39, 2
      %s41 = scalar_select %p40, 0, %s39
      %s42 = ssub.s32 %s29, %s41
      %s43 = ssub.s32 %s30, %s37
      %s44 = sor.u32 %s42, %s43
      %p45 = scmp.eq.s32.totalorder %s44, 0
      %s47 = sadd.s32 %s46, 1
      %s48 = scalar_select %p45, %s46, %s47
      %p51 = pneg %p45
      %p52 = scmp.eq.s32.totalorder %s22, 1
      %p53 = por %p51, %p52
      %p54 = scmp.ne.s32.totalorder %s46, %s49
      %p55 = scmp.eq.s32.totalorder %s22, 0
      %p56 = por %p54, %p55
      %p57 = scmp.ne.s32.totalorder %s46, %s49
      %p58 = scmp.eq.s32.totalorder %s27, 1
      %p59 = por %p57, %p58
      %p60 = scmp.ne.s32.totalorder %s49, %s50
      %p61 = scmp.eq.s32.totalorder %s27, 0
      %p62 = por %p60, %p61
      %p63 = scmp.ne.s32.totalorder %s49, %s50
      %p64 = scmp.eq.s32.totalorder %s28, 1
      %p65 = por %p63, %p64
      %p67 = scmp.ne.s32.totalorder %s50, %s66
      %p68 = scmp.eq.s32.totalorder %s28, 0
      %p69 = por %p67, %p68
      %s70 = ssub.s32 %s29, %s41
      %p71 = scmp.eq.s32.totalorder %s70, 0
      %s73 = sadd.s32 %s72, 1
      %s74 = scalar_select %p71, %s72, %s73
      %p77 = pneg %p71
      %p78 = scmp.eq.s32.totalorder %s22, 1
      %p79 = por %p77, %p78
      %p80 = scmp.ne.s32.totalorder %s72, %s75
      %p81 = scmp.eq.s32.totalorder %s22, 0
      %p82 = por %p80, %p81
      %p83 = scmp.ne.s32.totalorder %s72, %s75
      %p84 = scmp.eq.s32.totalorder %s27, 1
      %p85 = por %p83, %p84
      %p86 = scmp.ne.s32.totalorder %s75, %s76
      %p87 = scmp.eq.s32.totalorder %s27, 0
      %p88 = por %p86, %p87
      %p89 = scmp.ne.s32.totalorder %s75, %s76
      %p90 = scmp.eq.s32.totalorder %s28, 1
      %p91 = por %p89, %p90
      %p93 = scmp.ne.s32.totalorder %s76, %s92
      %p94 = scmp.eq.s32.totalorder %s28, 0
      %p95 = por %p93, %p94
      %s97 = sadd.s32 %s96, 1
      %p100 = scmp.eq.s32.totalorder %s22, 1
      %p101 = scmp.ne.s32.totalorder %s96, %s98
      %p102 = scmp.eq.s32.totalorder %s22, 0
      %p103 = por %p101, %p102
      %p104 = scmp.ne.s32.totalorder %s96, %s98
      %p105 = scmp.eq.s32.totalorder %s27, 1
      %p106 = por %p104, %p105
      %p107 = scmp.ne.s32.totalorder %s98, %s99
      %p108 = scmp.eq.s32.totalorder %s27, 0
      %p109 = por %p107, %p108
      %p110 = scmp.ne.s32.totalorder %s98, %s99
      %p111 = scmp.eq.s32.totalorder %s28, 1
      %p112 = por %p110, %p111
      %p114 = scmp.ne.s32.totalorder %s99, %s113
      %p115 = scmp.eq.s32.totalorder %s28, 0
      %p116 = por %p114, %p115
      %s118 = sadd.s32 %s117, 1
      %p121 = scmp.eq.s32.totalorder %s22, 1
      %p122 = scmp.ne.s32.totalorder %s117, %s119
      %p123 = scmp.eq.s32.totalorder %s22, 0
      %p124 = por %p122, %p123
      %p125 = scmp.ne.s32.totalorder %s117, %s119
      %p126 = scmp.eq.s32.totalorder %s27, 1
      %p127 = por %p125, %p126
      %p128 = scmp.ne.s32.totalorder %s119, %s120
      %p129 = scmp.eq.s32.totalorder %s27, 0
      %p130 = por %p128, %p129
      %p131 = scmp.ne.s32.totalorder %s119, %s120
      %p132 = scmp.eq.s32.totalorder %s28, 1
      %p133 = por %p131, %p132
      %p135 = scmp.ne.s32.totalorder %s120, %s134
      %p136 = scmp.eq.s32.totalorder %s28, 0
      %p137 = por %p135, %p136
      %s139 = sadd.s32 %s138, 1
      %p142 = scmp.eq.s32.totalorder %s22, 1
      %p143 = scmp.ne.s32.totalorder %s138, %s140
      %p144 = scmp.eq.s32.totalorder %s22, 0
      %p145 = por %p143, %p144
      %p146 = scmp.ne.s32.totalorder %s138, %s140
      %p147 = scmp.eq.s32.totalorder %s27, 1
      %p148 = por %p146, %p147
      %p149 = scmp.ne.s32.totalorder %s140, %s141
      %p150 = scmp.eq.s32.totalorder %s27, 0
      %p151 = por %p149, %p150
      %p152 = scmp.ne.s32.totalorder %s140, %s141
      %p153 = scmp.eq.s32.totalorder %s28, 1
      %p154 = por %p152, %p153
      %p156 = scmp.ne.s32.totalorder %s141, %s155
      %p157 = scmp.eq.s32.totalorder %s28, 0
      %p158 = por %p156, %p157
      %s160 = sadd.s32 %s159, 1
      %p163 = scmp.eq.s32.totalorder %s22, 1
      %p164 = scmp.ne.s32.totalorder %s159, %s161
      %p165 = scmp.eq.s32.totalorder %s22, 0
      %p166 = por %p164, %p165
      %p167 = scmp.ne.s32.totalorder %s159, %s161
      %p168 = scmp.eq.s32.totalorder %s27, 1
      %p169 = por %p167, %p168
      %p170 = scmp.ne.s32.totalorder %s161, %s162
      %p171 = scmp.eq.s32.totalorder %s27, 0
      %p172 = por %p170, %p171
      %p173 = scmp.ne.s32.totalorder %s161, %s162
      %p174 = scmp.eq.s32.totalorder %s28, 1
      %p175 = por %p173, %p174
      %p177 = scmp.ne.s32.totalorder %s162, %s176
      %p178 = scmp.eq.s32.totalorder %s28, 0
      %p179 = por %p177, %p178
      %s180 = ssub.s32 %s29, %s41
      %s181 = ssub.s32 %s30, %s37
      %s182 = sor.u32 %s180, %s181
      %p183 = scmp.eq.s32.totalorder %s182, 0
      %s185 = sadd.s32 %s184, 1
      %s186 = scalar_select %p183, %s184, %s185
      %p189 = pneg %p183
      %p190 = scmp.eq.s32.totalorder %s22, 1
      %p191 = por %p189, %p190
      %p192 = scmp.ne.s32.totalorder %s184, %s187
      %p193 = scmp.eq.s32.totalorder %s22, 0
      %p194 = por %p192, %p193
      %p195 = scmp.ne.s32.totalorder %s184, %s187
      %p196 = scmp.eq.s32.totalorder %s27, 1
      %p197 = por %p195, %p196
      %p198 = scmp.ne.s32.totalorder %s187, %s188
      %p199 = scmp.eq.s32.totalorder %s27, 0
      %p200 = por %p198, %p199
      %p201 = scmp.ne.s32.totalorder %s187, %s188
      %p202 = scmp.eq.s32.totalorder %s28, 1
      %p203 = por %p201, %p202
      %p205 = scmp.ne.s32.totalorder %s188, %s204
      %p206 = scmp.eq.s32.totalorder %s28, 0
      %p207 = por %p205, %p206
      %p208 = scmp.le.s32.totalorder 1, %s22
      %p209 = scmp.lt.s32.totalorder %s22, 3
      %p210 = pnand %p208, %p209
      %p211 = pneg %p210
      // Predicated region
      $region9: #{tpu_custom_call.1} parent=5 // pred_check
        _
      $region10: #{tpu_custom_call.1} parent=5 // pred_check_branch
        %213 = sbr.rel (%p210) target = $region12
      $region11: #{tpu_custom_call.1} parent=5 // pred_region
        %s214 = ssub.s32 %s22, 1
        // Predicated region
        $region13: #{tpu_custom_call.1} parent=11 // pred_check
          %p215 = pneg %p109
        $region14: #{tpu_custom_call.1} parent=11 // pred_check_branch
          %217 = sbr.rel (%p215) target = $region16
        $region15: #{tpu_custom_call.1} parent=11 // pred_region
          %s219 = ssub.s32 512, 512
          %220 = vsyncadd [#allocation7], %s219
          %s221 = sshll.u32 [#allocation8], 4
          %s222 = int_to_ptr.vmem [resolvable:$true] %s221
          %227 = dma.hbm_to_vmem [thread:$0]  %s2, 512, %s222, [#allocation7], 128, 128, 8
        $region16: #{tpu_custom_call.1} parent=11 // pred_fallthru
          _
        // Predicated region
        $region17: #{tpu_custom_call.1} parent=11 // pred_check
          %p228 = pneg %p130
        $region18: #{tpu_custom_call.1} parent=11 // pred_check_branch
          %230 = sbr.rel (%p228) target = $region20
        $region19: #{tpu_custom_call.1} parent=11 // pred_region
          _
        $region20: #{tpu_custom_call.1} parent=11 // pred_fallthru
          _
        // Predicated region
        $region21: #{tpu_custom_call.1} parent=11 // pred_check
          %p231 = pneg %p151
        $region22: #{tpu_custom_call.1} parent=11 // pred_check_branch
          %233 = sbr.rel (%p231) target = $region24
        $region23: #{tpu_custom_call.1} parent=11 // pred_region
          %s235 = ssub.s32 512, 512
          %236 = vsyncadd [#allocation10], %s235
          %s237 = sshll.u32 [#allocation9], 4
          %s238 = int_to_ptr.vmem [resolvable:$true] %s237
          %243 = dma.hbm_to_vmem [thread:$0]  %s4, 512, %s238, [#allocation10], 128, 128, 8
        $region24: #{tpu_custom_call.1} parent=11 // pred_fallthru
          _
        // Predicated region
        $region25: #{tpu_custom_call.1} parent=11 // pred_check
          %p244 = pneg %p172
        $region26: #{tpu_custom_call.1} parent=11 // pred_check_branch
          %246 = sbr.rel (%p244) target = $region28
        $region27: #{tpu_custom_call.1} parent=11 // pred_region
          _
        $region28: #{tpu_custom_call.1} parent=11 // pred_fallthru
          _
      $region12: #{tpu_custom_call.1} parent=5 // pred_fallthru
        _
      %p247 = scmp.lt.s32.totalorder %s22, 2
      // Predicated region
      $region29: #{tpu_custom_call.1} parent=5 // pred_check
        %p248 = pneg %p247
      $region30: #{tpu_custom_call.1} parent=5 // pred_check_branch
        %250 = sbr.rel (%p248) target = $region32
      $region31: #{tpu_custom_call.1} parent=5 // pred_region
        // Predicated region
        $region33: #{tpu_custom_call.1} parent=31 // pred_check
          %p251 = pneg %p56
        $region34: #{tpu_custom_call.1} parent=31 // pred_check_branch
          %253 = sbr.rel (%p251) target = $region36
        $region35: #{tpu_custom_call.1} parent=31 // pred_region
          %s254 = sand.u32 %s46, 1
          %s255 = scalar_lea.sflag [#allocation4], %s254
          %s256 = sand.u32 %s46, 1
          %s257 = smul.addr %s256, 8
          %s258 = scalar_lea.vmem [#allocation3], %s257
          %s260 = ssub.s32 128, 128
          %261 = vsyncadd %s255, %s260
          %s262 = sadd.s32 %s30, %s29
          %s263 = smul.addr %s262, 128
          %s264 = scalar_lea.hbm %s0, %s263
          %s266 = sshll.u32 %s258, 4
          %s267 = int_to_ptr.vmem [resolvable:$true] %s266
          %269 = dma.hbm_to_vmem [thread:$0]  %s264, 128, %s267, %s255
        $region36: #{tpu_custom_call.1} parent=31 // pred_fallthru
          _
        // Predicated region
        $region37: #{tpu_custom_call.1} parent=31 // pred_check
          %p270 = pneg %p82
        $region38: #{tpu_custom_call.1} parent=31 // pred_check_branch
          %272 = sbr.rel (%p270) target = $region40
        $region39: #{tpu_custom_call.1} parent=31 // pred_region
          %s273 = sand.u32 %s22, 1
          %s274 = scalar_lea.sflag [#allocation7], %s273
          %s275 = sand.u32 %s72, 1
          %s276 = smul.addr %s275, 8
          %s277 = scalar_lea.vmem [#allocation6], %s276
          %s279 = ssub.s32 128, 128
          %280 = vsyncadd %s274, %s279
          %s281 = smul.addr %s29, 128
          %s282 = scalar_lea.hbm %s1, %s281
          %s284 = sshll.u32 %s277, 4
          %s285 = int_to_ptr.vmem [resolvable:$true] %s284
          %287 = dma.hbm_to_vmem [thread:$0]  %s282, 128, %s285, %s274
        $region40: #{tpu_custom_call.1} parent=31 // pred_fallthru
          _
      $region32: #{tpu_custom_call.1} parent=5 // pred_fallthru
        _
      %p288 = scmp.le.s32.totalorder 1, %s22
      %p289 = scmp.lt.s32.totalorder %s22, 3
      %p290 = pnand %p288, %p289
      %p291 = pneg %p290
      // Predicated region
      $region41: #{tpu_custom_call.1} parent=5 // pred_check
        _
      $region42: #{tpu_custom_call.1} parent=5 // pred_check_branch
        %293 = sbr.rel (%p290) target = $region44
      $region43: #{tpu_custom_call.1} parent=5 // pred_region
        %s294 = ssub.s32 %s22, 1
        %s295 = sand.u32 %s49, 1
        %s296 = scalar_lea.sflag [#allocation4], %s295
        %s297 = sand.u32 %s49, 1
        %s298 = smul.addr %s297, 8
        %s299 = scalar_lea.vmem [#allocation3], %s298
        // Predicated region
        $region45: #{tpu_custom_call.1} parent=43 // pred_check
          %p300 = pneg %p62
        $region46: #{tpu_custom_call.1} parent=43 // pred_check_branch
          %302 = sbr.rel (%p300) target = $region48
        $region47: #{tpu_custom_call.1} parent=43 // pred_region
          %303 = dma.done %s296, 128
        $region48: #{tpu_custom_call.1} parent=43 // pred_fallthru
          _
        %s304 = sand.u32 %s27, 1
        %s305 = scalar_lea.sflag [#allocation7], %s304
        %s306 = sand.u32 %s75, 1
        %s307 = smul.addr %s306, 8
        %s308 = scalar_lea.vmem [#allocation6], %s307
        // Predicated region
        $region49: #{tpu_custom_call.1} parent=43 // pred_check
          %p309 = pneg %p88
        $region50: #{tpu_custom_call.1} parent=43 // pred_check_branch
          %311 = sbr.rel (%p309) target = $region52
        $region51: #{tpu_custom_call.1} parent=43 // pred_region
          %312 = dma.done %s305, 128
        $region52: #{tpu_custom_call.1} parent=43 // pred_fallthru
          _
        // Predicated region
        $region53: #{tpu_custom_call.1} parent=43 // pred_check
          %p313 = pneg %p109
        $region54: #{tpu_custom_call.1} parent=43 // pred_check_branch
          %315 = sbr.rel (%p313) target = $region56
        $region55: #{tpu_custom_call.1} parent=43 // pred_region
          %316 = dma.done [#allocation7], 512
        $region56: #{tpu_custom_call.1} parent=43 // pred_fallthru
          _
        // Predicated region
        $region57: #{tpu_custom_call.1} parent=43 // pred_check
          %p317 = pneg %p151
        $region58: #{tpu_custom_call.1} parent=43 // pred_check_branch
          %319 = sbr.rel (%p317) target = $region60
        $region59: #{tpu_custom_call.1} parent=43 // pred_region
          %320 = dma.done [#allocation10], 512
        $region60: #{tpu_custom_call.1} parent=43 // pred_fallthru
          _
        %s321 = sand.u32 %s49, 1
        %s322 = scalar_lea.sflag [#allocation4], %s321
        %s323 = sand.u32 %s49, 1
        %s324 = smul.addr %s323, 8
        %s325 = scalar_lea.vmem [#allocation3], %s324
        %p326 = pneg %p62
        %p327 = pneg %p59
        %s328 = sand.u32 %s27, 1
        %s329 = scalar_lea.sflag [#allocation7], %s328
        %s330 = sand.u32 %s75, 1
        %s331 = smul.addr %s330, 8
        %s332 = scalar_lea.vmem [#allocation6], %s331
        %p333 = pneg %p88
        %p334 = pneg %p85
        %p335 = pneg %p109
        %p336 = pneg %p106
        %p337 = pneg %p130
        %p338 = pneg %p127
        %p339 = pneg %p151
        %p340 = pneg %p148
        %p341 = pneg %p172
        %p342 = pneg %p169
        %p343 = pneg %p200
        %p344 = pneg %p197
        %s345 = sand.u32 %s187, 1
        %s346 = scalar_lea.sflag [#allocation5], %s345
        %s347 = sand.u32 %s187, 1
        %s348 = smul.addr %s347, 8
        %s349 = scalar_lea.vmem [#allocation11], %s348
        %p350 = scmp.eq.s32.totalorder %s32, 0
        // Predicated region
        $region61: #{tpu_custom_call.1} parent=43 // pred_check
          %p351 = pneg %p350
        $region62: #{tpu_custom_call.1} parent=43 // pred_check_branch
          %353 = sbr.rel (%p351) target = $region64
        $region63: #{tpu_custom_call.1} parent=43 // pred_region
          %v354 = vld [vmem:[%s308] sm:$0xff]
          %v355 = vld [vmem:[#allocation9] sm:$0xff]
          %v356 = vld [vmem:[#allocation9 + $0x8] sm:$0xff]
          %v357 = vld [vmem:[#allocation9 + $0x10] sm:$0xff]
          %v358 = vld [vmem:[#allocation9 + $0x18] sm:$0xff]
          %v359 = vld [vmem:[%s5] sm:$0x1]
          %v361 = vlaneseq
          %v362 = vshrl.u32 %v361, 7
          %v363 = vsub.s32 0, %v362
          %v364 = vrot.slane %v359, %v363
          %vm366 = vcmask 261120
          %v368 = vsel %vm366, %v354, 0
          %370 = vmatprep.subr.mxu0 0.0
          %371 = vmatpush1.msra.mxu0 %v355
          %372 = vmatprep.subr.mxu0 0.0
          %373 = vmatpush1.msra.mxu0 %v356
          %374 = vmatprep.subr.mxu0 0.0
          %375 = vmatpush1.msra.mxu0 %v357
          %376 = vmatprep.subr.mxu0 0.0
          %377 = vmatpush1.msra.mxu0 %v358
          %378 = vmatprep.subr.mxu0 0.0
          %379 = vmatpush1.msra.mxu0 0.0
          %380 = vmatprep.subr.mxu0 0.0
          %381 = vmatpush1.msra.mxu0 0.0
          %382 = vmatprep.subr.mxu0 0.0
          %383 = vmatpush1.msra.mxu0 0.0
          %384 = vmatprep.subr.mxu0 0.0
          %385 = vmatpush1.msra.mxu0 0.0
          %386 = vmatprep.subr.mxu0 0.0
          %387 = vmatpush1.msra.mxu0 0.0
          %388 = vmatprep.subr.mxu0 0.0
          %389 = vmatpush1.msra.mxu0 0.0
          %390 = vmatprep.subr.mxu0 0.0
          %391 = vmatpush1.msra.mxu0 0.0
          %392 = vmatprep.subr.mxu0 0.0
          %393 = vmatpush1.msra.mxu0 0.0
          %394 = vmatprep.subr.mxu0 0.0
          %395 = vmatpush1.msra.mxu0 0.0
          %396 = vmatprep.subr.mxu0 0.0
          %397 = vmatpush1.msra.mxu0 0.0
          %398 = vmatprep.subr.mxu0 0.0
          %399 = vmatpush1.msra.mxu0 0.0
          %400 = vmatprep.subr.mxu0 0.0
          %401 = vmatpush1.msra.mxu0 0.0
          %402 = vmatprep.subr.mxu0 0.0
          %403 = vmatpush1.msra.mxu0 0.0
          %404 = vmatprep.subr.mxu0 0.0
          %405 = vmatpush1.msra.mxu0 0.0
          %406 = vmatprep.subr.mxu0 0.0
          %407 = vmatpush1.msra.mxu0 0.0
          %408 = vmatprep.subr.mxu0 0.0
          %409 = vmatpush1.msra.mxu0 0.0
          %410 = vmatprep.subr.mxu0 0.0
          %411 = vmatpush1.msra.mxu0 0.0
          %412 = vmatprep.subr.mxu0 0.0
          %413 = vmatpush1.msra.mxu0 0.0
          %414 = vmatprep.subr.mxu0 0.0
          %415 = vmatpush1.msra.mxu0 0.0
          %416 = vmatprep.subr.mxu0 0.0
          %417 = vmatpush1.msra.mxu0 0.0
          %418 = vmatprep.subr.mxu0 0.0
          %419 = vmatpush1.msra.mxu0 0.0
          %420 = vmatprep.subr.mxu0 0.0
          %421 = vmatpush1.msra.mxu0 0.0
          %422 = vmatprep.subr.mxu0 0.0
          %423 = vmatpush1.msra.mxu0 0.0
          %424 = vmatprep.subr.mxu0 0.0
          %425 = vmatpush1.msra.mxu0 0.0
          %426 = vmatprep.subr.mxu0 0.0
          %427 = vmatpush1.msra.mxu0 0.0
          %428 = vmatprep.subr.mxu0 0.0
          %429 = vmatpush1.msra.mxu0 0.0
          %430 = vmatprep.subr.mxu0 0.0
          %431 = vmatpush1.msra.mxu0 0.0
          %432 = vmatprep.subr.mxu0 0.0
          %433 = vmatpush1.msra.mxu0 0.0
          %434 = vmatprep.mubr.f32.mxu0 0.0
          %435 = vmatmul.mubr.f32.gmra.mrb[0].mxu0 %v368
          %v436 = vpop.f32.mrb[0].mxu0
          %v437 = vadd.f32 %v364, %v436
          %v438 = vpop.f32.mrb[0].mxu0
          %439 = vdwg.mxu0
          %vm440 = vcmask 523264
          %441 = vst.msk [vmem:[#allocation2] sm:$0xff] %vm440, %v437
        $region64: #{tpu_custom_call.1} parent=43 // pred_fallthru
          _
        %v442 = vld [vmem:[%s299] sm:$0xff]
        %v443 = vld [vmem:[#allocation8] sm:$0xff]
        %v444 = vld [vmem:[#allocation8 + $0x8] sm:$0xff]
        %v445 = vld [vmem:[#allocation8 + $0x10] sm:$0xff]
        %v446 = vld [vmem:[#allocation8 + $0x18] sm:$0xff]
        %v447 = vld [vmem:[%s3] sm:$0x1]
        %v449 = vlaneseq
        %v450 = vshrl.u32 %v449, 7
        %v451 = vsub.s32 0, %v450
        %v452 = vrot.slane %v447, %v451
        %vm454 = vcmask 261120
        %v456 = vsel %vm454, %v442, 0
        %458 = vmatprep.subr.mxu0 0.0
        %459 = vmatpush1.msra.mxu0 %v443
        %460 = vmatprep.subr.mxu0 0.0
        %461 = vmatpush1.msra.mxu0 %v444
        %462 = vmatprep.subr.mxu0 0.0
        %463 = vmatpush1.msra.mxu0 %v445
        %464 = vmatprep.subr.mxu0 0.0
        %465 = vmatpush1.msra.mxu0 %v446
        %466 = vmatprep.subr.mxu0 0.0
        %467 = vmatpush1.msra.mxu0 0.0
        %468 = vmatprep.subr.mxu0 0.0
        %469 = vmatpush1.msra.mxu0 0.0
        %470 = vmatprep.subr.mxu0 0.0
        %471 = vmatpush1.msra.mxu0 0.0
        %472 = vmatprep.subr.mxu0 0.0
        %473 = vmatpush1.msra.mxu0 0.0
        %474 = vmatprep.subr.mxu0 0.0
        %475 = vmatpush1.msra.mxu0 0.0
        %476 = vmatprep.subr.mxu0 0.0
        %477 = vmatpush1.msra.mxu0 0.0
        %478 = vmatprep.subr.mxu0 0.0
        %479 = vmatpush1.msra.mxu0 0.0
        %480 = vmatprep.subr.mxu0 0.0
        %481 = vmatpush1.msra.mxu0 0.0
        %482 = vmatprep.subr.mxu0 0.0
        %483 = vmatpush1.msra.mxu0 0.0
        %484 = vmatprep.subr.mxu0 0.0
        %485 = vmatpush1.msra.mxu0 0.0
        %486 = vmatprep.subr.mxu0 0.0
        %487 = vmatpush1.msra.mxu0 0.0
        %488 = vmatprep.subr.mxu0 0.0
        %489 = vmatpush1.msra.mxu0 0.0
        %490 = vmatprep.subr.mxu0 0.0
        %491 = vmatpush1.msra.mxu0 0.0
        %492 = vmatprep.subr.mxu0 0.0
        %493 = vmatpush1.msra.mxu0 0.0
        %494 = vmatprep.subr.mxu0 0.0
        %495 = vmatpush1.msra.mxu0 0.0
        %496 = vmatprep.subr.mxu0 0.0
        %497 = vmatpush1.msra.mxu0 0.0
        %498 = vmatprep.subr.mxu0 0.0
        %499 = vmatpush1.msra.mxu0 0.0
        %500 = vmatprep.subr.mxu0 0.0
        %501 = vmatpush1.msra.mxu0 0.0
        %502 = vmatprep.subr.mxu0 0.0
        %503 = vmatpush1.msra.mxu0 0.0
        %504 = vmatprep.subr.mxu0 0.0
        %505 = vmatpush1.msra.mxu0 0.0
        %506 = vmatprep.subr.mxu0 0.0
        %507 = vmatpush1.msra.mxu0 0.0
        %508 = vmatprep.subr.mxu0 0.0
        %509 = vmatpush1.msra.mxu0 0.0
        %510 = vmatprep.subr.mxu0 0.0
        %511 = vmatpush1.msra.mxu0 0.0
        %512 = vmatprep.subr.mxu0 0.0
        %513 = vmatpush1.msra.mxu0 0.0
        %514 = vmatprep.subr.mxu0 0.0
        %515 = vmatpush1.msra.mxu0 0.0
        %516 = vmatprep.subr.mxu0 0.0
        %517 = vmatpush1.msra.mxu0 0.0
        %518 = vmatprep.subr.mxu0 0.0
        %519 = vmatpush1.msra.mxu0 0.0
        %520 = vmatprep.subr.mxu0 0.0
        %521 = vmatpush1.msra.mxu0 0.0
        %522 = vmatprep.mubr.f32.mxu0 0.0
        %523 = vmatmul.mubr.f32.gmra.mrb[0].mxu0 %v456
        %v524 = vpop.f32.mrb[0].mxu0
        %v525 = vadd.f32 %v452, %v524
        %v526 = vpop.f32.mrb[0].mxu0
        %527 = vdwg.mxu0
        %v528 = vld [vmem:[#allocation2] sm:$0xff]
        %vm529 = vcmask 64512
        %v531 = vsel %vm529, %v525, 0
        %v534 = vsel %vm529, %v528, 0
        %536 = vmatprep.subr.mxu0 0.0
        %537 = vmatpush1.xpose.msra.mxu0 %v534
        %538 = vmatprep.subr.mxu0 0.0
        %539 = vmatpush1.xpose.msra.mxu0 0.0
        %540 = vmatprep.subr.mxu0 0.0
        %541 = vmatpush1.xpose.msra.mxu0 0.0
        %542 = vmatprep.subr.mxu0 0.0
        %543 = vmatpush1.xpose.msra.mxu0 0.0
        %544 = vmatprep.subr.mxu0 0.0
        %545 = vmatpush1.xpose.msra.mxu0 0.0
        %546 = vmatprep.subr.mxu0 0.0
        %547 = vmatpush1.xpose.msra.mxu0 0.0
        %548 = vmatprep.subr.mxu0 0.0
        %549 = vmatpush1.xpose.msra.mxu0 0.0
        %550 = vmatprep.subr.mxu0 0.0
        %551 = vmatpush1.xpose.msra.mxu0 0.0
        %552 = vmatprep.subr.mxu0 0.0
        %553 = vmatpush1.xpose.msra.mxu0 0.0
        %554 = vmatprep.subr.mxu0 0.0
        %555 = vmatpush1.xpose.msra.mxu0 0.0
        %556 = vmatprep.subr.mxu0 0.0
        %557 = vmatpush1.xpose.msra.mxu0 0.0
        %558 = vmatprep.subr.mxu0 0.0
        %559 = vmatpush1.xpose.msra.mxu0 0.0
        %560 = vmatprep.subr.mxu0 0.0
        %561 = vmatpush1.xpose.msra.mxu0 0.0
        %562 = vmatprep.subr.mxu0 0.0
        %563 = vmatpush1.xpose.msra.mxu0 0.0
        %564 = vmatprep.subr.mxu0 0.0
        %565 = vmatpush1.xpose.msra.mxu0 0.0
        %566 = vmatprep.subr.mxu0 0.0
        %567 = vmatpush1.xpose.msra.mxu0 0.0
        %568 = vmatprep.subr.mxu0 0.0
        %569 = vmatpush1.xpose.msra.mxu0 0.0
        %570 = vmatprep.subr.mxu0 0.0
        %571 = vmatpush1.xpose.msra.mxu0 0.0
        %572 = vmatprep.subr.mxu0 0.0
        %573 = vmatpush1.xpose.msra.mxu0 0.0
        %574 = vmatprep.subr.mxu0 0.0
        %575 = vmatpush1.xpose.msra.mxu0 0.0
        %576 = vmatprep.subr.mxu0 0.0
        %577 = vmatpush1.xpose.msra.mxu0 0.0
        %578 = vmatprep.subr.mxu0 0.0
        %579 = vmatpush1.xpose.msra.mxu0 0.0
        %580 = vmatprep.subr.mxu0 0.0
        %581 = vmatpush1.xpose.msra.mxu0 0.0
        %582 = vmatprep.subr.mxu0 0.0
        %583 = vmatpush1.xpose.msra.mxu0 0.0
        %584 = vmatprep.subr.mxu0 0.0
        %585 = vmatpush1.xpose.msra.mxu0 0.0
        %586 = vmatprep.subr.mxu0 0.0
        %587 = vmatpush1.xpose.msra.mxu0 0.0
        %588 = vmatprep.subr.mxu0 0.0
        %589 = vmatpush1.xpose.msra.mxu0 0.0
        %590 = vmatprep.subr.mxu0 0.0
        %591 = vmatpush1.xpose.msra.mxu0 0.0
        %592 = vmatprep.subr.mxu0 0.0
        %593 = vmatpush1.xpose.msra.mxu0 0.0
        %594 = vmatprep.subr.mxu0 0.0
        %595 = vmatpush1.xpose.msra.mxu0 0.0
        %596 = vmatprep.subr.mxu0 0.0
        %597 = vmatpush1.xpose.msra.mxu0 0.0
        %598 = vmatprep.subr.mxu0 0.0
        %599 = vmatpush1.xpose.msra.mxu0 0.0
        %600 = vmatprep.mubr.f32.mxu0 0.0
        %601 = vmatmul.mubr.f32.gmra.mrb[0].mxu0 %v531
        %v602 = vpop.f32.mrb[0].mxu0
        %v603 = vadd.f32 0.0, %v602
        %v604 = vpop.f32.mrb[0].mxu0
        %605 = vdwg.mxu0
        %v606 = vmul.f32 %v603, 0.35355338
        %v607 = vsel %vm529, %v606, -inf
        %608 = vmax.xlane.f32.xlu0 %v607
        %v609 = vpop.xlane.xlu0 %608
        %v610 = vsub.f32 %v606, %v609
        %v611 = vmul.f32 %v610, 1.442695
        %v612 = vpow.pop %v611
        %v613 = vsel %vm529, %v612, 0.0
        %614 = vadd.xlane.f32.xlu0 %v613
        %v615 = vpop.xlane.xlu0 %614
        %v616 = vrcp.pop %v615
        %v617 = vmul.f32 %v612, %v616
        %618 = vrot.lane.b32.xlu0 %v528, 96
        %v619 = vpop.permute.xlu0 %618
        %v622 = vsel %vm529, %v617, 0
        %624 = vmatprep.subr.mxu0 0.0
        %625 = vmatpush1.msra.mxu0 %v619
        %626 = vmatprep.subr.mxu0 0.0
        %627 = vmatpush1.msra.mxu0 0.0
        %628 = vmatprep.subr.mxu0 0.0
        %629 = vmatpush1.msra.mxu0 0.0
        %630 = vmatprep.subr.mxu0 0.0
        %631 = vmatpush1.msra.mxu0 0.0
        %632 = vmatprep.subr.mxu0 0.0
        %633 = vmatpush1.msra.mxu0 0.0
        %634 = vmatprep.subr.mxu0 0.0
        %635 = vmatpush1.msra.mxu0 0.0
        %636 = vmatprep.subr.mxu0 0.0
        %637 = vmatpush1.msra.mxu0 0.0
        %638 = vmatprep.subr.mxu0 0.0
        %639 = vmatpush1.msra.mxu0 0.0
        %640 = vmatprep.subr.mxu0 0.0
        %641 = vmatpush1.msra.mxu0 0.0
        %642 = vmatprep.subr.mxu0 0.0
        %643 = vmatpush1.msra.mxu0 0.0
        %644 = vmatprep.subr.mxu0 0.0
        %645 = vmatpush1.msra.mxu0 0.0
        %646 = vmatprep.subr.mxu0 0.0
        %647 = vmatpush1.msra.mxu0 0.0
        %648 = vmatprep.subr.mxu0 0.0
        %649 = vmatpush1.msra.mxu0 0.0
        %650 = vmatprep.subr.mxu0 0.0
        %651 = vmatpush1.msra.mxu0 0.0
        %652 = vmatprep.subr.mxu0 0.0
        %653 = vmatpush1.msra.mxu0 0.0
        %654 = vmatprep.subr.mxu0 0.0
        %655 = vmatpush1.msra.mxu0 0.0
        %656 = vmatprep.subr.mxu0 0.0
        %657 = vmatpush1.msra.mxu0 0.0
        %658 = vmatprep.subr.mxu0 0.0
        %659 = vmatpush1.msra.mxu0 0.0
        %660 = vmatprep.subr.mxu0 0.0
        %661 = vmatpush1.msra.mxu0 0.0
        %662 = vmatprep.subr.mxu0 0.0
        %663 = vmatpush1.msra.mxu0 0.0
        %664 = vmatprep.subr.mxu0 0.0
        %665 = vmatpush1.msra.mxu0 0.0
        %666 = vmatprep.subr.mxu0 0.0
        %667 = vmatpush1.msra.mxu0 0.0
        %668 = vmatprep.subr.mxu0 0.0
        %669 = vmatpush1.msra.mxu0 0.0
        %670 = vmatprep.subr.mxu0 0.0
        %671 = vmatpush1.msra.mxu0 0.0
        %672 = vmatprep.subr.mxu0 0.0
        %673 = vmatpush1.msra.mxu0 0.0
        %674 = vmatprep.subr.mxu0 0.0
        %675 = vmatpush1.msra.mxu0 0.0
        %676 = vmatprep.subr.mxu0 0.0
        %677 = vmatpush1.msra.mxu0 0.0
        %678 = vmatprep.subr.mxu0 0.0
        %679 = vmatpush1.msra.mxu0 0.0
        %680 = vmatprep.subr.mxu0 0.0
        %681 = vmatpush1.msra.mxu0 0.0
        %682 = vmatprep.subr.mxu0 0.0
        %683 = vmatpush1.msra.mxu0 0.0
        %684 = vmatprep.subr.mxu0 0.0
        %685 = vmatpush1.msra.mxu0 0.0
        %686 = vmatprep.subr.mxu0 0.0
        %687 = vmatpush1.msra.mxu0 0.0
        %688 = vmatprep.mubr.f32.mxu0 0.0
        %689 = vmatmul.mubr.f32.gmra.mrb[0].mxu0 %v622
        %v690 = vpop.f32.mrb[0].mxu0
        %v691 = vadd.f32 0.0, %v690
        %v692 = vpop.f32.mrb[0].mxu0
        %693 = vdwg.mxu0
        %694 = vst.msk [vmem:[%s349] sm:$0xff] %vm529, %v691
        %v695 = vld [vmem:[#allocation2] sm:$0xff]
        %696 = vrot.lane.b32.xlu0 %v525, 120
        %v697 = vpop.permute.xlu0 %696
        %699 = vrot.lane.b32.xlu0 %v695, 120
        %v700 = vpop.permute.xlu0 %699
        %v701 = vsel %vm529, %v697, 0
        %v703 = vsel %vm529, %v700, 0
        %705 = vmatprep.subr.mxu0 0.0
        %706 = vmatpush1.xpose.msra.mxu0 %v703
        %707 = vmatprep.subr.mxu0 0.0
        %708 = vmatpush1.xpose.msra.mxu0 0.0
        %709 = vmatprep.subr.mxu0 0.0
        %710 = vmatpush1.xpose.msra.mxu0 0.0
        %711 = vmatprep.subr.mxu0 0.0
        %712 = vmatpush1.xpose.msra.mxu0 0.0
        %713 = vmatprep.subr.mxu0 0.0
        %714 = vmatpush1.xpose.msra.mxu0 0.0
        %715 = vmatprep.subr.mxu0 0.0
        %716 = vmatpush1.xpose.msra.mxu0 0.0
        %717 = vmatprep.subr.mxu0 0.0
        %718 = vmatpush1.xpose.msra.mxu0 0.0
        %719 = vmatprep.subr.mxu0 0.0
        %720 = vmatpush1.xpose.msra.mxu0 0.0
        %721 = vmatprep.subr.mxu0 0.0
        %722 = vmatpush1.xpose.msra.mxu0 0.0
        %723 = vmatprep.subr.mxu0 0.0
        %724 = vmatpush1.xpose.msra.mxu0 0.0
        %725 = vmatprep.subr.mxu0 0.0
        %726 = vmatpush1.xpose.msra.mxu0 0.0
        %727 = vmatprep.subr.mxu0 0.0
        %728 = vmatpush1.xpose.msra.mxu0 0.0
        %729 = vmatprep.subr.mxu0 0.0
        %730 = vmatpush1.xpose.msra.mxu0 0.0
        %731 = vmatprep.subr.mxu0 0.0
        %732 = vmatpush1.xpose.msra.mxu0 0.0
        %733 = vmatprep.subr.mxu0 0.0
        %734 = vmatpush1.xpose.msra.mxu0 0.0
        %735 = vmatprep.subr.mxu0 0.0
        %736 = vmatpush1.xpose.msra.mxu0 0.0
        %737 = vmatprep.subr.mxu0 0.0
        %738 = vmatpush1.xpose.msra.mxu0 0.0
        %739 = vmatprep.subr.mxu0 0.0
        %740 = vmatpush1.xpose.msra.mxu0 0.0
        %741 = vmatprep.subr.mxu0 0.0
        %742 = vmatpush1.xpose.msra.mxu0 0.0
        %743 = vmatprep.subr.mxu0 0.0
        %744 = vmatpush1.xpose.msra.mxu0 0.0
        %745 = vmatprep.subr.mxu0 0.0
        %746 = vmatpush1.xpose.msra.mxu0 0.0
        %747 = vmatprep.subr.mxu0 0.0
        %748 = vmatpush1.xpose.msra.mxu0 0.0
        %749 = vmatprep.subr.mxu0 0.0
        %750 = vmatpush1.xpose.msra.mxu0 0.0
        %751 = vmatprep.subr.mxu0 0.0
        %752 = vmatpush1.xpose.msra.mxu0 0.0
        %753 = vmatprep.subr.mxu0 0.0
        %754 = vmatpush1.xpose.msra.mxu0 0.0
        %755 = vmatprep.subr.mxu0 0.0
        %756 = vmatpush1.xpose.msra.mxu0 0.0
        %757 = vmatprep.subr.mxu0 0.0
        %758 = vmatpush1.xpose.msra.mxu0 0.0
        %759 = vmatprep.subr.mxu0 0.0
        %760 = vmatpush1.xpose.msra.mxu0 0.0
        %761 = vmatprep.subr.mxu0 0.0
        %762 = vmatpush1.xpose.msra.mxu0 0.0
        %763 = vmatprep.subr.mxu0 0.0
        %764 = vmatpush1.xpose.msra.mxu0 0.0
        %765 = vmatprep.subr.mxu0 0.0
        %766 = vmatpush1.xpose.msra.mxu0 0.0
        %767 = vmatprep.subr.mxu0 0.0
        %768 = vmatpush1.xpose.msra.mxu0 0.0
        %769 = vmatprep.mubr.f32.mxu0 0.0
        %770 = vmatmul.mubr.f32.gmra.mrb[0].mxu0 %v701
        %v771 = vpop.f32.mrb[0].mxu0
        %v772 = vadd.f32 0.0, %v771
        %v773 = vpop.f32.mrb[0].mxu0
        %774 = vdwg.mxu0
        %v775 = vmul.f32 %v772, 0.35355338
        %v776 = vsel %vm529, %v775, -inf
        %777 = vmax.xlane.f32.xlu0 %v776
        %v778 = vpop.xlane.xlu0 %777
        %v779 = vsub.f32 %v775, %v778
        %v780 = vmul.f32 %v779, 1.442695
        %v781 = vpow.pop %v780
        %v782 = vsel %vm529, %v781, 0.0
        %783 = vadd.xlane.f32.xlu0 %v782
        %v784 = vpop.xlane.xlu0 %783
        %v785 = vrcp.pop %v784
        %v786 = vmul.f32 %v781, %v785
        %787 = vrot.lane.b32.xlu0 %v695, 88
        %v788 = vpop.permute.xlu0 %787
        %v791 = vsel %vm529, %v786, 0
        %793 = vmatprep.subr.mxu0 0.0
        %794 = vmatpush1.msra.mxu0 %v788
        %795 = vmatprep.subr.mxu0 0.0
        %796 = vmatpush1.msra.mxu0 0.0
        %797 = vmatprep.subr.mxu0 0.0
        %798 = vmatpush1.msra.mxu0 0.0
        %799 = vmatprep.subr.mxu0 0.0
        %800 = vmatpush1.msra.mxu0 0.0
        %801 = vmatprep.subr.mxu0 0.0
        %802 = vmatpush1.msra.mxu0 0.0
        %803 = vmatprep.subr.mxu0 0.0
        %804 = vmatpush1.msra.mxu0 0.0
        %805 = vmatprep.subr.mxu0 0.0
        %806 = vmatpush1.msra.mxu0 0.0
        %807 = vmatprep.subr.mxu0 0.0
        %808 = vmatpush1.msra.mxu0 0.0
        %809 = vmatprep.subr.mxu0 0.0
        %810 = vmatpush1.msra.mxu0 0.0
        %811 = vmatprep.subr.mxu0 0.0
        %812 = vmatpush1.msra.mxu0 0.0
        %813 = vmatprep.subr.mxu0 0.0
        %814 = vmatpush1.msra.mxu0 0.0
        %815 = vmatprep.subr.mxu0 0.0
        %816 = vmatpush1.msra.mxu0 0.0
        %817 = vmatprep.subr.mxu0 0.0
        %818 = vmatpush1.msra.mxu0 0.0
        %819 = vmatprep.subr.mxu0 0.0
        %820 = vmatpush1.msra.mxu0 0.0
        %821 = vmatprep.subr.mxu0 0.0
        %822 = vmatpush1.msra.mxu0 0.0
        %823 = vmatprep.subr.mxu0 0.0
        %824 = vmatpush1.msra.mxu0 0.0
        %825 = vmatprep.subr.mxu0 0.0
        %826 = vmatpush1.msra.mxu0 0.0
        %827 = vmatprep.subr.mxu0 0.0
        %828 = vmatpush1.msra.mxu0 0.0
        %829 = vmatprep.subr.mxu0 0.0
        %830 = vmatpush1.msra.mxu0 0.0
        %831 = vmatprep.subr.mxu0 0.0
        %832 = vmatpush1.msra.mxu0 0.0
        %833 = vmatprep.subr.mxu0 0.0
        %834 = vmatpush1.msra.mxu0 0.0
        %835 = vmatprep.subr.mxu0 0.0
        %836 = vmatpush1.msra.mxu0 0.0
        %837 = vmatprep.subr.mxu0 0.0
        %838 = vmatpush1.msra.mxu0 0.0
        %839 = vmatprep.subr.mxu0 0.0
        %840 = vmatpush1.msra.mxu0 0.0
        %841 = vmatprep.subr.mxu0 0.0
        %842 = vmatpush1.msra.mxu0 0.0
        %843 = vmatprep.subr.mxu0 0.0
        %844 = vmatpush1.msra.mxu0 0.0
        %845 = vmatprep.subr.mxu0 0.0
        %846 = vmatpush1.msra.mxu0 0.0
        %847 = vmatprep.subr.mxu0 0.0
        %848 = vmatpush1.msra.mxu0 0.0
        %849 = vmatprep.subr.mxu0 0.0
        %850 = vmatpush1.msra.mxu0 0.0
        %851 = vmatprep.subr.mxu0 0.0
        %852 = vmatpush1.msra.mxu0 0.0
        %853 = vmatprep.subr.mxu0 0.0
        %854 = vmatpush1.msra.mxu0 0.0
        %855 = vmatprep.subr.mxu0 0.0
        %856 = vmatpush1.msra.mxu0 0.0
        %857 = vmatprep.mubr.f32.mxu0 0.0
        %858 = vmatmul.mubr.f32.gmra.mrb[0].mxu0 %v791
        %v859 = vpop.f32.mrb[0].mxu0
        %v860 = vadd.f32 0.0, %v859
        %v861 = vpop.f32.mrb[0].mxu0
        %862 = vdwg.mxu0
        %864 = vrot.lane.b32.xlu0 %v860, 8
        %v865 = vpop.permute.xlu0 %864
        %vm867 = vcmask 130112
        %868 = vst.msk [vmem:[%s349] sm:$0xff] %vm867, %v865
        %v869 = vld [vmem:[#allocation2] sm:$0xff]
        %870 = vrot.lane.b32.xlu0 %v525, 112
        %v871 = vpop.permute.xlu0 %870
        %873 = vrot.lane.b32.xlu0 %v869, 112
        %v874 = vpop.permute.xlu0 %873
        %v875 = vsel %vm529, %v871, 0
        %v877 = vsel %vm529, %v874, 0
        %879 = vmatprep.subr.mxu0 0.0
        %880 = vmatpush1.xpose.msra.mxu0 %v877
        %881 = vmatprep.subr.mxu0 0.0
        %882 = vmatpush1.xpose.msra.mxu0 0.0
        %883 = vmatprep.subr.mxu0 0.0
        %884 = vmatpush1.xpose.msra.mxu0 0.0
        %885 = vmatprep.subr.mxu0 0.0
        %886 = vmatpush1.xpose.msra.mxu0 0.0
        %887 = vmatprep.subr.mxu0 0.0
        %888 = vmatpush1.xpose.msra.mxu0 0.0
        %889 = vmatprep.subr.mxu0 0.0
        %890 = vmatpush1.xpose.msra.mxu0 0.0
        %891 = vmatprep.subr.mxu0 0.0
        %892 = vmatpush1.xpose.msra.mxu0 0.0
        %893 = vmatprep.subr.mxu0 0.0
        %894 = vmatpush1.xpose.msra.mxu0 0.0
        %895 = vmatprep.subr.mxu0 0.0
        %896 = vmatpush1.xpose.msra.mxu0 0.0
        %897 = vmatprep.subr.mxu0 0.0
        %898 = vmatpush1.xpose.msra.mxu0 0.0
        %899 = vmatprep.subr.mxu0 0.0
        %900 = vmatpush1.xpose.msra.mxu0 0.0
        %901 = vmatprep.subr.mxu0 0.0
        %902 = vmatpush1.xpose.msra.mxu0 0.0
        %903 = vmatprep.subr.mxu0 0.0
        %904 = vmatpush1.xpose.msra.mxu0 0.0
        %905 = vmatprep.subr.mxu0 0.0
        %906 = vmatpush1.xpose.msra.mxu0 0.0
        %907 = vmatprep.subr.mxu0 0.0
        %908 = vmatpush1.xpose.msra.mxu0 0.0
        %909 = vmatprep.subr.mxu0 0.0
        %910 = vmatpush1.xpose.msra.mxu0 0.0
        %911 = vmatprep.subr.mxu0 0.0
        %912 = vmatpush1.xpose.msra.mxu0 0.0
        %913 = vmatprep.subr.mxu0 0.0
        %914 = vmatpush1.xpose.msra.mxu0 0.0
        %915 = vmatprep.subr.mxu0 0.0
        %916 = vmatpush1.xpose.msra.mxu0 0.0
        %917 = vmatprep.subr.mxu0 0.0
        %918 = vmatpush1.xpose.msra.mxu0 0.0
        %919 = vmatprep.subr.mxu0 0.0
        %920 = vmatpush1.xpose.msra.mxu0 0.0
        %921 = vmatprep.subr.mxu0 0.0
        %922 = vmatpush1.xpose.msra.mxu0 0.0
        %923 = vmatprep.subr.mxu0 0.0
        %924 = vmatpush1.xpose.msra.mxu0 0.0
        %925 = vmatprep.subr.mxu0 0.0
        %926 = vmatpush1.xpose.msra.mxu0 0.0
        %927 = vmatprep.subr.mxu0 0.0
        %928 = vmatpush1.xpose.msra.mxu0 0.0
        %929 = vmatprep.subr.mxu0 0.0
        %930 = vmatpush1.xpose.msra.mxu0 0.0
        %931 = vmatprep.subr.mxu0 0.0
        %932 = vmatpush1.xpose.msra.mxu0 0.0
        %933 = vmatprep.subr.mxu0 0.0
        %934 = vmatpush1.xpose.msra.mxu0 0.0
        %935 = vmatprep.subr.mxu0 0.0
        %936 = vmatpush1.xpose.msra.mxu0 0.0
        %937 = vmatprep.subr.mxu0 0.0
        %938 = vmatpush1.xpose.msra.mxu0 0.0
        %939 = vmatprep.subr.mxu0 0.0
        %940 = vmatpush1.xpose.msra.mxu0 0.0
        %941 = vmatprep.subr.mxu0 0.0
        %942 = vmatpush1.xpose.msra.mxu0 0.0
        %943 = vmatprep.mubr.f32.mxu0 0.0
        %944 = vmatmul.mubr.f32.gmra.mrb[0].mxu0 %v875
        %v945 = vpop.f32.mrb[0].mxu0
        %v946 = vadd.f32 0.0, %v945
        %v947 = vpop.f32.mrb[0].mxu0
        %948 = vdwg.mxu0
        %v949 = vmul.f32 %v946, 0.35355338
        %v950 = vsel %vm529, %v949, -inf
        %951 = vmax.xlane.f32.xlu0 %v950
        %v952 = vpop.xlane.xlu0 %951
        %v953 = vsub.f32 %v949, %v952
        %v954 = vmul.f32 %v953, 1.442695
        %v955 = vpow.pop %v954
        %v956 = vsel %vm529, %v955, 0.0
        %957 = vadd.xlane.f32.xlu0 %v956
        %v958 = vpop.xlane.xlu0 %957
        %v959 = vrcp.pop %v958
        %v960 = vmul.f32 %v955, %v959
        %961 = vrot.lane.b32.xlu0 %v869, 80
        %v962 = vpop.permute.xlu0 %961
        %v965 = vsel %vm529, %v960, 0
        %967 = vmatprep.subr.mxu0 0.0
        %968 = vmatpush1.msra.mxu0 %v962
        %969 = vmatprep.subr.mxu0 0.0
        %970 = vmatpush1.msra.mxu0 0.0
        %971 = vmatprep.subr.mxu0 0.0
        %972 = vmatpush1.msra.mxu0 0.0
        %973 = vmatprep.subr.mxu0 0.0
        %974 = vmatpush1.msra.mxu0 0.0
        %975 = vmatprep.subr.mxu0 0.0
        %976 = vmatpush1.msra.mxu0 0.0
        %977 = vmatprep.subr.mxu0 0.0
        %978 = vmatpush1.msra.mxu0 0.0
        %979 = vmatprep.subr.mxu0 0.0
        %980 = vmatpush1.msra.mxu0 0.0
        %981 = vmatprep.subr.mxu0 0.0
        %982 = vmatpush1.msra.mxu0 0.0
        %983 = vmatprep.subr.mxu0 0.0
        %984 = vmatpush1.msra.mxu0 0.0
        %985 = vmatprep.subr.mxu0 0.0
        %986 = vmatpush1.msra.mxu0 0.0
        %987 = vmatprep.subr.mxu0 0.0
        %988 = vmatpush1.msra.mxu0 0.0
        %989 = vmatprep.subr.mxu0 0.0
        %990 = vmatpush1.msra.mxu0 0.0
        %991 = vmatprep.subr.mxu0 0.0
        %992 = vmatpush1.msra.mxu0 0.0
        %993 = vmatprep.subr.mxu0 0.0
        %994 = vmatpush1.msra.mxu0 0.0
        %995 = vmatprep.subr.mxu0 0.0
        %996 = vmatpush1.msra.mxu0 0.0
        %997 = vmatprep.subr.mxu0 0.0
        %998 = vmatpush1.msra.mxu0 0.0
        %999 = vmatprep.subr.mxu0 0.0
        %1000 = vmatpush1.msra.mxu0 0.0
        %1001 = vmatprep.subr.mxu0 0.0
        %1002 = vmatpush1.msra.mxu0 0.0
        %1003 = vmatprep.subr.mxu0 0.0
        %1004 = vmatpush1.msra.mxu0 0.0
        %1005 = vmatprep.subr.mxu0 0.0
        %1006 = vmatpush1.msra.mxu0 0.0
        %1007 = vmatprep.subr.mxu0 0.0
        %1008 = vmatpush1.msra.mxu0 0.0
        %1009 = vmatprep.subr.mxu0 0.0
        %1010 = vmatpush1.msra.mxu0 0.0
        %1011 = vmatprep.subr.mxu0 0.0
        %1012 = vmatpush1.msra.mxu0 0.0
        %1013 = vmatprep.subr.mxu0 0.0
        %1014 = vmatpush1.msra.mxu0 0.0
        %1015 = vmatprep.subr.mxu0 0.0
        %1016 = vmatpush1.msra.mxu0 0.0
        %1017 = vmatprep.subr.mxu0 0.0
        %1018 = vmatpush1.msra.mxu0 0.0
        %1019 = vmatprep.subr.mxu0 0.0
        %1020 = vmatpush1.msra.mxu0 0.0
        %1021 = vmatprep.subr.mxu0 0.0
        %1022 = vmatpush1.msra.mxu0 0.0
        %1023 = vmatprep.subr.mxu0 0.0
        %1024 = vmatpush1.msra.mxu0 0.0
        %1025 = vmatprep.subr.mxu0 0.0
        %1026 = vmatpush1.msra.mxu0 0.0
        %1027 = vmatprep.subr.mxu0 0.0
        %1028 = vmatpush1.msra.mxu0 0.0
        %1029 = vmatprep.subr.mxu0 0.0
        %1030 = vmatpush1.msra.mxu0 0.0
        %1031 = vmatprep.mubr.f32.mxu0 0.0
        %1032 = vmatmul.mubr.f32.gmra.mrb[0].mxu0 %v965
        %v1033 = vpop.f32.mrb[0].mxu0
        %v1034 = vadd.f32 0.0, %v1033
        %v1035 = vpop.f32.mrb[0].mxu0
        %1036 = vdwg.mxu0
        %1038 = vrot.lane.b32.xlu0 %v1034, 16
        %v1039 = vpop.permute.xlu0 %1038
        %vm1041 = vcmask 195712
        %1042 = vst.msk [vmem:[%s349] sm:$0xff] %vm1041, %v1039
        %v1043 = vld [vmem:[#allocation2] sm:$0xff]
        %1044 = vrot.lane.b32.xlu0 %v525, 104
        %v1045 = vpop.permute.xlu0 %1044
        %1047 = vrot.lane.b32.xlu0 %v1043, 104
        %v1048 = vpop.permute.xlu0 %1047
        %v1049 = vsel %vm529, %v1045, 0
        %v1051 = vsel %vm529, %v1048, 0
        %1053 = vmatprep.subr.mxu0 0.0
        %1054 = vmatpush1.xpose.msra.mxu0 %v1051
        %1055 = vmatprep.subr.mxu0 0.0
        %1056 = vmatpush1.xpose.msra.mxu0 0.0
        %1057 = vmatprep.subr.mxu0 0.0
        %1058 = vmatpush1.xpose.msra.mxu0 0.0
        %1059 = vmatprep.subr.mxu0 0.0
        %1060 = vmatpush1.xpose.msra.mxu0 0.0
        %1061 = vmatprep.subr.mxu0 0.0
        %1062 = vmatpush1.xpose.msra.mxu0 0.0
        %1063 = vmatprep.subr.mxu0 0.0
        %1064 = vmatpush1.xpose.msra.mxu0 0.0
        %1065 = vmatprep.subr.mxu0 0.0
        %1066 = vmatpush1.xpose.msra.mxu0 0.0
        %1067 = vmatprep.subr.mxu0 0.0
        %1068 = vmatpush1.xpose.msra.mxu0 0.0
        %1069 = vmatprep.subr.mxu0 0.0
        %1070 = vmatpush1.xpose.msra.mxu0 0.0
        %1071 = vmatprep.subr.mxu0 0.0
        %1072 = vmatpush1.xpose.msra.mxu0 0.0
        %1073 = vmatprep.subr.mxu0 0.0
        %1074 = vmatpush1.xpose.msra.mxu0 0.0
        %1075 = vmatprep.subr.mxu0 0.0
        %1076 = vmatpush1.xpose.msra.mxu0 0.0
        %1077 = vmatprep.subr.mxu0 0.0
        %1078 = vmatpush1.xpose.msra.mxu0 0.0
        %1079 = vmatprep.subr.mxu0 0.0
        %1080 = vmatpush1.xpose.msra.mxu0 0.0
        %1081 = vmatprep.subr.mxu0 0.0
        %1082 = vmatpush1.xpose.msra.mxu0 0.0
        %1083 = vmatprep.subr.mxu0 0.0
        %1084 = vmatpush1.xpose.msra.mxu0 0.0
        %1085 = vmatprep.subr.mxu0 0.0
        %1086 = vmatpush1.xpose.msra.mxu0 0.0
        %1087 = vmatprep.subr.mxu0 0.0
        %1088 = vmatpush1.xpose.msra.mxu0 0.0
        %1089 = vmatprep.subr.mxu0 0.0
        %1090 = vmatpush1.xpose.msra.mxu0 0.0
        %1091 = vmatprep.subr.mxu0 0.0
        %1092 = vmatpush1.xpose.msra.mxu0 0.0
        %1093 = vmatprep.subr.mxu0 0.0
        %1094 = vmatpush1.xpose.msra.mxu0 0.0
        %1095 = vmatprep.subr.mxu0 0.0
        %1096 = vmatpush1.xpose.msra.mxu0 0.0
        %1097 = vmatprep.subr.mxu0 0.0
        %1098 = vmatpush1.xpose.msra.mxu0 0.0
        %1099 = vmatprep.subr.mxu0 0.0
        %1100 = vmatpush1.xpose.msra.mxu0 0.0
        %1101 = vmatprep.subr.mxu0 0.0
        %1102 = vmatpush1.xpose.msra.mxu0 0.0
        %1103 = vmatprep.subr.mxu0 0.0
        %1104 = vmatpush1.xpose.msra.mxu0 0.0
        %1105 = vmatprep.subr.mxu0 0.0
        %1106 = vmatpush1.xpose.msra.mxu0 0.0
        %1107 = vmatprep.subr.mxu0 0.0
        %1108 = vmatpush1.xpose.msra.mxu0 0.0
        %1109 = vmatprep.subr.mxu0 0.0
        %1110 = vmatpush1.xpose.msra.mxu0 0.0
        %1111 = vmatprep.subr.mxu0 0.0
        %1112 = vmatpush1.xpose.msra.mxu0 0.0
        %1113 = vmatprep.subr.mxu0 0.0
        %1114 = vmatpush1.xpose.msra.mxu0 0.0
        %1115 = vmatprep.subr.mxu0 0.0
        %1116 = vmatpush1.xpose.msra.mxu0 0.0
        %1117 = vmatprep.mubr.f32.mxu0 0.0
        %1118 = vmatmul.mubr.f32.gmra.mrb[0].mxu0 %v1049
        %v1119 = vpop.f32.mrb[0].mxu0
        %v1120 = vadd.f32 0.0, %v1119
        %v1121 = vpop.f32.mrb[0].mxu0
        %1122 = vdwg.mxu0
        %v1123 = vmul.f32 %v1120, 0.35355338
        %v1124 = vsel %vm529, %v1123, -inf
        %1125 = vmax.xlane.f32.xlu0 %v1124
        %v1126 = vpop.xlane.xlu0 %1125
        %v1127 = vsub.f32 %v1123, %v1126
        %v1128 = vmul.f32 %v1127, 1.442695
        %v1129 = vpow.pop %v1128
        %v1130 = vsel %vm529, %v1129, 0.0
        %1131 = vadd.xlane.f32.xlu0 %v1130
        %v1132 = vpop.xlane.xlu0 %1131
        %v1133 = vrcp.pop %v1132
        %v1134 = vmul.f32 %v1129, %v1133
        %1135 = vrot.lane.b32.xlu0 %v1043, 72
        %v1136 = vpop.permute.xlu0 %1135
        %v1139 = vsel %vm529, %v1134, 0
        %1141 = vmatprep.subr.mxu0 0.0
        %1142 = vmatpush1.msra.mxu0 %v1136
        %1143 = vmatprep.subr.mxu0 0.0
        %1144 = vmatpush1.msra.mxu0 0.0
        %1145 = vmatprep.subr.mxu0 0.0
        %1146 = vmatpush1.msra.mxu0 0.0
        %1147 = vmatprep.subr.mxu0 0.0
        %1148 = vmatpush1.msra.mxu0 0.0
        %1149 = vmatprep.subr.mxu0 0.0
        %1150 = vmatpush1.msra.mxu0 0.0
        %1151 = vmatprep.subr.mxu0 0.0
        %1152 = vmatpush1.msra.mxu0 0.0
        %1153 = vmatprep.subr.mxu0 0.0
        %1154 = vmatpush1.msra.mxu0 0.0
        %1155 = vmatprep.subr.mxu0 0.0
        %1156 = vmatpush1.msra.mxu0 0.0
        %1157 = vmatprep.subr.mxu0 0.0
        %1158 = vmatpush1.msra.mxu0 0.0
        %1159 = vmatprep.subr.mxu0 0.0
        %1160 = vmatpush1.msra.mxu0 0.0
        %1161 = vmatprep.subr.mxu0 0.0
        %1162 = vmatpush1.msra.mxu0 0.0
        %1163 = vmatprep.subr.mxu0 0.0
        %1164 = vmatpush1.msra.mxu0 0.0
        %1165 = vmatprep.subr.mxu0 0.0
        %1166 = vmatpush1.msra.mxu0 0.0
        %1167 = vmatprep.subr.mxu0 0.0
        %1168 = vmatpush1.msra.mxu0 0.0
        %1169 = vmatprep.subr.mxu0 0.0
        %1170 = vmatpush1.msra.mxu0 0.0
        %1171 = vmatprep.subr.mxu0 0.0
        %1172 = vmatpush1.msra.mxu0 0.0
        %1173 = vmatprep.subr.mxu0 0.0
        %1174 = vmatpush1.msra.mxu0 0.0
        %1175 = vmatprep.subr.mxu0 0.0
        %1176 = vmatpush1.msra.mxu0 0.0
        %1177 = vmatprep.subr.mxu0 0.0
        %1178 = vmatpush1.msra.mxu0 0.0
        %1179 = vmatprep.subr.mxu0 0.0
        %1180 = vmatpush1.msra.mxu0 0.0
        %1181 = vmatprep.subr.mxu0 0.0
        %1182 = vmatpush1.msra.mxu0 0.0
        %1183 = vmatprep.subr.mxu0 0.0
        %1184 = vmatpush1.msra.mxu0 0.0
        %1185 = vmatprep.subr.mxu0 0.0
        %1186 = vmatpush1.msra.mxu0 0.0
        %1187 = vmatprep.subr.mxu0 0.0
        %1188 = vmatpush1.msra.mxu0 0.0
        %1189 = vmatprep.subr.mxu0 0.0
        %1190 = vmatpush1.msra.mxu0 0.0
        %1191 = vmatprep.subr.mxu0 0.0
        %1192 = vmatpush1.msra.mxu0 0.0
        %1193 = vmatprep.subr.mxu0 0.0
        %1194 = vmatpush1.msra.mxu0 0.0
        %1195 = vmatprep.subr.mxu0 0.0
        %1196 = vmatpush1.msra.mxu0 0.0
        %1197 = vmatprep.subr.mxu0 0.0
        %1198 = vmatpush1.msra.mxu0 0.0
        %1199 = vmatprep.subr.mxu0 0.0
        %1200 = vmatpush1.msra.mxu0 0.0
        %1201 = vmatprep.subr.mxu0 0.0
        %1202 = vmatpush1.msra.mxu0 0.0
        %1203 = vmatprep.subr.mxu0 0.0
        %1204 = vmatpush1.msra.mxu0 0.0
        %1205 = vmatprep.mubr.f32.mxu0 0.0
        %1206 = vmatmul.mubr.f32.gmra.mrb[0].mxu0 %v1139
        %v1207 = vpop.f32.mrb[0].mxu0
        %v1208 = vadd.f32 0.0, %v1207
        %v1209 = vpop.f32.mrb[0].mxu0
        %1210 = vdwg.mxu0
        %1212 = vrot.lane.b32.xlu0 %v1208, 24
        %v1213 = vpop.permute.xlu0 %1212
        %vm1215 = vcmask 261312
        %1216 = vst.msk [vmem:[%s349] sm:$0xff] %vm1215, %v1213
        %s1217 = sand.u32 %s187, 1
        %s1218 = scalar_lea.sflag [#allocation5], %s1217
        %s1219 = sand.u32 %s187, 1
        %s1220 = smul.addr %s1219, 8
        %s1221 = scalar_lea.vmem [#allocation11], %s1220
        // Predicated region
        $region65: #{tpu_custom_call.1} parent=43 // pred_check
          %p1222 = pneg %p197
        $region66: #{tpu_custom_call.1} parent=43 // pred_check_branch
          %1224 = sbr.rel (%p1222) target = $region68
        $region67: #{tpu_custom_call.1} parent=43 // pred_region
          %s1226 = ssub.s32 128, 128
          %1227 = vsyncadd %s1218, %s1226
          %s1228 = sadd.s32 %s32, %s31
          %s1229 = smul.addr %s1228, 128
          %s1230 = scalar_lea.hbm %s6, %s1229
          %s1232 = sshll.u32 %s1221, 4
          %s1233 = int_to_ptr.vmem [resolvable:$true] %s1232
          %1235 = dma.vmem_to_hbm [thread:$0]  %s1233, 128, %s1230, %s1218
        $region68: #{tpu_custom_call.1} parent=43 // pred_fallthru
          _
      $region44: #{tpu_custom_call.1} parent=5 // pred_fallthru
        _
      %p1236 = scmp.le.s32.totalorder 2, %s22
      // Predicated region
      $region69: #{tpu_custom_call.1} parent=5 // pred_check
        %p1237 = pneg %p1236
      $region70: #{tpu_custom_call.1} parent=5 // pred_check_branch
        %1239 = sbr.rel (%p1237) target = $region72
      $region71: #{tpu_custom_call.1} parent=5 // pred_region
        %s1240 = ssub.s32 %s22, 2
        // Predicated region
        $region73: #{tpu_custom_call.1} parent=71 // pred_check
          %p1241 = pneg %p203
        $region74: #{tpu_custom_call.1} parent=71 // pred_check_branch
          %1243 = sbr.rel (%p1241) target = $region76
        $region75: #{tpu_custom_call.1} parent=71 // pred_region
          %s1244 = sand.u32 %s188, 1
          %s1245 = scalar_lea.sflag [#allocation5], %s1244
          %s1246 = sand.u32 %s188, 1
          %s1247 = smul.addr %s1246, 8
          %s1248 = scalar_lea.vmem [#allocation11], %s1247
          %1249 = dma.done %s1245, 128
        $region76: #{tpu_custom_call.1} parent=71 // pred_fallthru
          _
      $region72: #{tpu_custom_call.1} parent=5 // pred_fallthru
        _
    $region6: #{tpu_custom_call.1} parent=1 // loop_footer
      %s26 = sadd.s32 1, %s22
    $region7: #{tpu_custom_call.1} parent=1 // loop_footer_branch
      %21 = sbr.rel target = $region3
    $region8: #{tpu_custom_call.1} parent=1 // loop_exit
      _
    %1250 = vsyncpa [#allocation4], 1
    %s1251 = scalar_lea.sflag [#allocation4], 1
    %1252 = vsyncpa %s1251, 1
    %1253 = vsyncpa [#allocation7], 1
    %s1254 = scalar_lea.sflag [#allocation7], 1
    %1255 = vsyncpa %s1254, 1
    %1256 = vsyncpa [#allocation10], 1
    %1257 = vsyncpa [#allocation5], 1
    %s1258 = scalar_lea.sflag [#allocation5], 1
    %1259 = vsyncpa %s1258, 1

</llo_original>
